<compile_context>
chip_gen: v7x
topology: tpu7x:2x2x1
jax: 0.10.0
libtpu: 0.0.40
codegen_flags: <defaults>
</compile_context>

<pallas_src>
import math

import jax
import jax.numpy as jnp
from jax import lax
from jax.experimental import pallas as pl
from jax.experimental.pallas import tpu as pltpu


def _round_up(a, m):
    return ((a + m - 1) // m) * m


def _vmem_cap_bytes(default=64 * 1024 * 1024):
    """Physical VMEM per TensorCore; falls back to the v7x-safe 64 MiB."""
    try:
        info = pltpu.get_tpu_info()
        cap = getattr(info, "vmem_capacity_bytes", None)
        if cap:
            return int(cap)
    except Exception:
        pass
    return default


def _vmem_limit_bytes():
    cap = _vmem_cap_bytes()
    return max(32 * 1024 * 1024, min(int(0.85 * cap), 100 * 1024 * 1024))


# ----------------------------------------------------------------------------
# glue: length math (mirrors nemo's calc_length)
# ----------------------------------------------------------------------------
def calc_length(lengths, all_paddings, kernel_size, stride, ceil_mode, repeat_num=1):
    add_pad = float(all_paddings - kernel_size)
    L = lengths.astype(jnp.float32)
    for _ in range(repeat_num):
        L = (L + add_pad) / float(stride) + 1.0
        L = jnp.ceil(L) if ceil_mode else jnp.floor(L)
    return L.astype(jnp.int32)


# ----------------------------------------------------------------------------
# reduction='striding'  (ConvSubsampling('striding', factor=2))
# ----------------------------------------------------------------------------
def _striding_tiles(M, F_out, C, D, cbytes, vmem_budget):
    """Pick (tile_m, tile_f).  tile_f bounds the double-buffered Linear-weight
    K-slice (the dominant VMEM resident); tile_m is as large as fits so each
    K-pass over that weight is amortized over many rows."""
    w_budget = int(0.40 * vmem_budget)
    tile_f = 32
    while tile_f > 1 and 2 * tile_f * C * D * cbytes > w_budget:
        tile_f //= 2
    tile_f = max(1, min(tile_f, F_out))

    def vmem_need(tm):
        wbuf = 2 * tile_f * C * D * cbytes          # weight K-slice (double-buffered)
        pbuf = 2 * tile_f * tm * 128 * cbytes       # patches block (9 lane-padded to 128)
        acc = tm * D * 4                            # f32 accumulator scratch
        part = tm * D * 4                           # per-step partial sum
        hbuf = 2 * tm * C * (4 + cbytes)            # conv output (f32) + compute-dtype copy
        obuf = 2 * tm * D * 4                       # output block
        return wbuf + pbuf + acc + part + hbuf + obuf

    tile_m = 512
    while tile_m > 32 and vmem_need(tile_m) > int(0.9 * vmem_budget):
        tile_m //= 2
    if M < tile_m:
        tile_m = _round_up(max(M, 16), 16)
    return tile_m, tile_f


def striding_reduction(x, lengths, params, *, tile_m=None, tile_f=None,
                       compute_dtype=jnp.bfloat16, out_dtype=None):
    """Conv2d(1->C, 3x3, stride=2, pad=1) + ReLU with time masking, then
    Linear(C*F_out -> D).  Returns (y [B, T_out, D], out_lengths [B])."""
    B, T, F = x.shape
    D = params["b_lin"].shape[0]
    C = params["b_conv"].shape[0]
    T_out = (T - 1) // 2 + 1
    F_out = (F - 1) // 2 + 1
    M = B * T_out
    out_dtype = x.dtype if out_dtype is None else out_dtype
    cbytes = jnp.dtype(compute_dtype).itemsize

    out_lengths = calc_length(lengths, all_paddings=2, kernel_size=3, stride=2,
                              ceil_mode=False, repeat_num=1)

    # ---- per-chip tiling -----------------------------------------------------
    vmem_limit = _vmem_limit_bytes()
    auto_m, auto_f = _striding_tiles(M, F_out, C, D, cbytes, vmem_limit)
    tile_m = auto_m if tile_m is None else tile_m
    tile_f = auto_f if tile_f is None else tile_f
    assert tile_m % 16 == 0 and tile_f >= 1
    M_pad = _round_up(M, tile_m)
    F_pad = _round_up(F_out, tile_f)
    nm, nk = M_pad // tile_m, F_pad // tile_f

    # ---- glue: masking, zero-pad, im2col taps (plain JAX / XLA) ---------------
    tmask = (jnp.arange(T)[None, :] < lengths[:, None]).astype(x.dtype)
    xm = x * tmask[:, :, None]
    xp = jnp.pad(xm, ((0, 0), (1, 1), (1, 1)))
    cols = [xp[:, kt:kt + 2 * T_out:2, kf:kf + 2 * F_out:2]
            for kt in range(3) for kf in range(3)]
    patches = jnp.stack(cols, axis=-1)                       # [B, T_out, F_out, 9]
    # [F_pad, M_pad, 9]: f-columns on the K grid axis, flattened (b, t_out) rows
    # as the M axis (long contiguous DMA runs over m; taps stay minor so the
    # block's last dim is always taken in full).
    patches = jnp.transpose(patches, (2, 0, 1, 3)).reshape(F_out, M, 9)
    patches = jnp.pad(patches, ((0, F_pad - F_out), (0, M_pad - M), (0, 0)))
    patches = patches.astype(compute_dtype)

    # conv weight as a [9, C] matmul operand (tap index k = kt*3 + kf)
    w_conv_m = params["w_conv"].reshape(C, 9).T.astype(compute_dtype)
    b_conv = params["b_conv"].reshape(1, C).astype(jnp.float32)

    # Linear weight regrouped per output-frequency column:
    #   wl[fo, c, d] = w_lin[d, c*F_out + fo]   (PyTorch flattening is c-major).
    # Padded fo rows are zero, so padded patch columns contribute exactly 0.
    w_lin = params["w_lin"]                                  # [D, C*F_out]
    wl = jnp.transpose(w_lin.reshape(D, C, F_out), (2, 1, 0))
    wl = jnp.pad(wl, ((0, F_pad - F_out), (0, 0), (0, 0))).astype(compute_dtype)
    b_lin = params["b_lin"].reshape(1, D).astype(jnp.float32)

    # Per-row {0,1} output mask (row m = b*T_out + t_out is valid iff
    # t_out < out_lengths[b]); padded rows (m >= B*T_out) are also 0.
    rowmask = (jnp.arange(T_out)[None, :] < out_lengths[:, None]).astype(jnp.float32)
    rowmask = jnp.pad(rowmask.reshape(M, 1), ((0, M_pad - M), (0, 0)))

    def kernel(mask_ref, p_ref, wc_ref, bc_ref, wl_ref, bl_ref, o_ref, acc_ref):
        kf = pl.program_id(1)

        @pl.when(kf == 0)
        def _():
            acc_ref[...] = jnp.zeros_like(acc_ref)

        # One K-slice of the fused conv+Linear, unrolled over tile_f frequency
        # columns.  Per f: conv as im2col matmul [tile_m, 9] @ [9, C]
        # (compute_dtype operands, f32 accumulate), bias + ReLU on the VPU, then
        # the Linear contribution [tile_m, C] @ [C, D].  No relayouts anywhere.
        s = None
        for f in range(tile_f):
            hf = jnp.dot(p_ref[f], wc_ref[...], preferred_element_type=jnp.float32)
            hf = jnp.maximum(hf + bc_ref[...], 0.0).astype(compute_dtype)
            df = jnp.dot(hf, wl_ref[f], preferred_element_type=jnp.float32)
            s = df if s is None else s + df
        acc_ref[...] += s

        @pl.when(kf == pl.num_programs(1) - 1)
        def _():
            # rows t >= out_len must be exactly b_lin (reference zeroes the conv
            # output before the Linear); multiply-by-mask is bit-identical.
            o_ref[...] = (acc_ref[...] * mask_ref[...] + bl_ref[...]).astype(o_ref.dtype)

    flops = 2 * M_pad * F_pad * 9 * C + 2 * M_pad * F_pad * C * D
    bytes_accessed = (patches.size * patches.dtype.itemsize
                      + nm * wl.size * wl.dtype.itemsize     # weight streamed once per M-tile
                      + M_pad * D * jnp.dtype(out_dtype).itemsize
                      + M_pad * 4)

    y = pl.pallas_call(
        kernel,
        grid=(nm, nk),
        in_specs=[
            pl.BlockSpec((tile_m, 1), lambda m, k: (m, 0)),
            pl.BlockSpec((tile_f, tile_m, 9), lambda m, k: (k, m, 0)),
            pl.BlockSpec((9, C), lambda m, k: (0, 0)),
            pl.BlockSpec((1, C), lambda m, k: (0, 0)),
            pl.BlockSpec((tile_f, C, D), lambda m, k: (k, 0, 0)),
            pl.BlockSpec((1, D), lambda m, k: (0, 0)),
        ],
        out_specs=pl.BlockSpec((tile_m, D), lambda m, k: (m, 0)),
        out_shape=jax.ShapeDtypeStruct((M_pad, D), out_dtype),
        scratch_shapes=[pltpu.VMEM((tile_m, D), jnp.float32)],
        compiler_params=pltpu.CompilerParams(
            # flattened M axis is "parallel" (keeps v7x's 2 TCs busy as long as
            # nm >= 2); the Linear K-reduction axis is innermost / "arbitrary".
            dimension_semantics=("parallel", "arbitrary"),
            vmem_limit_bytes=vmem_limit),
        cost_estimate=pl.CostEstimate(flops=int(flops), transcendentals=0,
                                      bytes_accessed=int(bytes_accessed)),
    )(rowmask, patches, w_conv_m, b_conv, wl, b_lin)

    y = y[:M].reshape(B, T_out, D) if M_pad != M else y.reshape(B, T_out, D)
    return y, out_lengths


# ----------------------------------------------------------------------------
# reduction='pooling'  (MaxPool1d(kernel_size=reduction_factor) over time)
# ----------------------------------------------------------------------------
def pooling_reduction(x, lengths, reduction_factor=2, *, tile_t=None):
    B, T, D = x.shape
    k = int(reduction_factor)
    assert k >= 1 and (k & (k - 1)) == 0, "reduction_factor must be a power of 2"
    T_out = (T - k) // k + 1
    # NOTE: the module applies calc_length(kernel=k, stride=k) log2(k) times;
    # exact for the default k=2, re-check against NeMo if k>2 is ever used.
    out_lengths = calc_length(lengths, all_paddings=0, kernel_size=k, stride=k,
                              ceil_mode=False, repeat_num=max(1, k.bit_length() - 1))

    M = B * T_out
    itemsize = x.dtype.itemsize
    if tile_t is None:
        # Input block is (tile_t, k, D); k sits on the sublane axis and is padded
        # to 8 in VMEM, so budget with the padded size (<= ~8 MiB double-buffered).
        tile_t = 512
        while tile_t > 16 and 2 * tile_t * max(k, 8) * D * itemsize > (8 << 20):
            tile_t //= 2
    if M < tile_t:
        tile_t = _round_up(max(M, 8), 8)
    M_pad = _round_up(M, tile_t)

    # contiguous (free) reshape: window on its own (full-extent) axis, D stays
    # lane-dense; (B, T_out) flattened so small batches still fill the grid.
    xw = x[:, :T_out * k, :].reshape(M, k, D)
    if M_pad != M:
        xw = jnp.pad(xw, ((0, M_pad - M), (0, 0), (0, 0)))

    def kernel(x_ref, o_ref):
        o_ref[...] = jnp.max(x_ref[...], axis=1).astype(o_ref.dtype)

    # TODO(synk): for D % 128 == 0, a (tile_t, k*D) view with k static lane
    # slices would avoid the sublane padding of the k axis entirely.
    y = pl.pallas_call(
        kernel,
        grid=(M_pad // tile_t,),
        in_specs=[pl.BlockSpec((tile_t, k, D), lambda m: (m, 0, 0))],
        out_specs=pl.BlockSpec((tile_t, D), lambda m: (m, 0)),
        out_shape=jax.ShapeDtypeStruct((M_pad, D), x.dtype),
        compiler_params=pltpu.CompilerParams(
            dimension_semantics=("parallel",),
            vmem_limit_bytes=_vmem_limit_bytes()),
    )(xw)
    y = y[:M].reshape(B, T_out, D) if M_pad != M else y.reshape(B, T_out, D)
    return y, out_lengths


def subsampling_reduction_module(x, lengths, reduction, params=None, **kwargs):
    """Forward of SubsamplingReductionModule (reduction_factor=2)."""
    if reduction == "striding":
        return striding_reduction(x, lengths, params, **kwargs)
    if reduction == "pooling":
        return pooling_reduction(x, lengths, 2, **kwargs)
    raise ValueError(reduction)


# ----------------------------------------------------------------------------
# pure-JAX reference (validation only)
# ----------------------------------------------------------------------------
def ref_striding(x, lengths, params):
    B, T, F = x.shape
    T_out = (T - 1) // 2 + 1
    tmask = (jnp.arange(T)[None, :] < lengths[:, None]).astype(x.dtype)
    xm = (x * tmask[:, :, None])[:, None]                    # [B,1,T,F]
    h = lax.conv_general_dilated(xm, params["w_conv"], (2, 2), ((1, 1), (1, 1)),
                                 dimension_numbers=("NCHW", "OIHW", "NCHW"),
                                 precision=lax.Precision.HIGHEST)
    h = jnp.maximum(h + params["b_conv"][None, :, None, None], 0.0)
    out_len = calc_length(lengths, 2, 3, 2, False, 1)
    omask = (jnp.arange(T_out)[None, :] < out_len[:, None]).astype(x.dtype)
    h = h * omask[:, None, :, None]
    hf = jnp.transpose(h, (0, 2, 1, 3)).reshape(B, T_out, -1)
    y = jnp.einsum("btk,dk->btd", hf, params["w_lin"],
                   precision=lax.Precision.HIGHEST) + params["b_lin"][None, None, :]
    return y, out_len


if __name__ == "__main__":
    B, T, D = 2, 32, 32          # batch=2, seq=32, d_model=32 (toy shapes)
    key = jax.random.PRNGKey(0)
    kx, kwc, kbc, kwl, kbl = jax.random.split(key, 5)
    x = jax.random.normal(kx, (B, T, D), jnp.float32)
    lengths = jnp.array([32, 17], jnp.int32)

    # synthetic parameters with ConvSubsampling('striding', factor=2) shapes
    F_out = (D - 1) // 2 + 1
    bc = 1.0 / 3.0
    bl = 1.0 / math.sqrt(D * F_out)
    params = dict(
        w_conv=jax.random.uniform(kwc, (D, 1, 3, 3), jnp.float32, -bc, bc),
        b_conv=jax.random.uniform(kbc, (D,), jnp.float32, -bc, bc),
        w_lin=jax.random.uniform(kwl, (D, D * F_out), jnp.float32, -bl, bl),
        b_lin=jax.random.uniform(kbl, (D,), jnp.float32, -bl, bl),
    )

    y_ref, len_ref = ref_striding(x, lengths, params)

    # 1) exact f32 path, multi-tile grid: 2 M-tiles x 3 K-tiles with
    #    F_pad(18) > F_out(16) -> exercises accumulator + zero-padded K rows.
    y_s, len_s = subsampling_reduction_module(
        x, lengths, "striding", params, tile_m=16, tile_f=6,
        compute_dtype=jnp.float32)
    jax.block_until_ready(y_s)
    assert y_s.shape == (B, (T - 1) // 2 + 1, D)
    assert jnp.allclose(y_s, y_ref, atol=1e-3, rtol=1e-3), \
        float(jnp.max(jnp.abs(y_s - y_ref)))
    assert jnp.array_equal(len_s, len_ref)

    # 2) bf16 MXU path (production default) on the same explicit tiling.
    y_b, _ = subsampling_reduction_module(
        x, lengths, "striding", params, tile_m=16, tile_f=6,
        compute_dtype=jnp.bfloat16)
    jax.block_until_ready(y_b)
    assert jnp.allclose(y_b, y_ref, atol=5e-2, rtol=5e-2), \
        float(jnp.max(jnp.abs(y_b - y_ref)))

    # 3) auto-tiled default path (tile sizes derived from the chip's VMEM).
    y_d, len_d = subsampling_reduction_module(x, lengths, "striding", params)
    jax.block_until_ready(y_d)
    assert jnp.allclose(y_d, y_ref, atol=5e-2, rtol=5e-2), \
        float(jnp.max(jnp.abs(y_d - y_ref)))
    assert jnp.array_equal(len_d, len_ref)

    # 4) reduction='pooling' (Pallas, flattened (B, T_out) grid) vs reference.
    y_p, len_p = subsampling_reduction_module(x, lengths, "pooling", tile_t=16)
    jax.block_until_ready(y_p)
    y_p_ref = jnp.max(x.reshape(B, T // 2, 2, D), axis=2)
    assert jnp.allclose(y_p, y_p_ref, atol=1e-6)
    assert jnp.array_equal(len_p, jnp.array([16, 8], jnp.int32))

    print("KERNEL_OK")
</pallas_src>

<mosaic_0001>
module attributes {stable_mosaic.version = 11 : i64} {
  func.func @kernel(%arg0: i32, %arg1: i32, %arg2: memref<16x1xf32, #tpu.memory_space<vmem>>, %arg3: memref<6x16x9xf32, #tpu.memory_space<vmem>>, %arg4: memref<9x32xf32, #tpu.memory_space<vmem>>, %arg5: memref<1x32xf32, #tpu.memory_space<vmem>>, %arg6: memref<6x32x32xf32, #tpu.memory_space<vmem>>, %arg7: memref<1x32xf32, #tpu.memory_space<vmem>>, %arg8: memref<16x32xf32, #tpu.memory_space<vmem>>, %arg9: memref<16x32xf32, #tpu.memory_space<vmem>>) attributes {dimension_semantics = [#tpu.dimension_semantics<parallel>, #tpu.dimension_semantics<arbitrary>], iteration_bounds = array<i64: 2, 3>, scalar_prefetch = 0 : i64, scratch_operands = 1 : i64, tpu.core_type = #tpu.core_type<tc>, window_params = [{transform_indices = @transform_0, window_bounds = array<i64: 16, 1>}, {transform_indices = @transform_1, window_bounds = array<i64: 6, 16, 9>}, {pipeline_mode = #tpu.pipeline_mode<synchronous>, transform_indices = @transform_2, window_bounds = array<i64: 9, 32>}, {pipeline_mode = #tpu.pipeline_mode<synchronous>, transform_indices = @transform_3, window_bounds = array<i64: 1, 32>}, {transform_indices = @transform_4, window_bounds = array<i64: 6, 32, 32>}, {pipeline_mode = #tpu.pipeline_mode<synchronous>, transform_indices = @transform_5, window_bounds = array<i64: 1, 32>}, {transform_indices = @transform_6, window_bounds = array<i64: 16, 32>}]} {
    %c0_i32 = arith.constant 0 : i32
    %0 = arith.cmpi eq, %arg1, %c0_i32 : i32
    %1 = arith.extui %0 : i1 to i32
    %c0_i32_0 = arith.constant 0 : i32
    %2 = arith.cmpi ne, %1, %c0_i32_0 : i32
    scf.if %2 {
      %cst_77 = arith.constant 0.000000e+00 : f32
      %86 = vector.broadcast %cst_77 : f32 to vector<16x32xf32>
      %c0_78 = arith.constant 0 : index
      %c0_79 = arith.constant 0 : index
      %87 = vector.load %arg9[%c0_78, %c0_79] : memref<16x32xf32, #tpu.memory_space<vmem>>, vector<16x32xf32>
      tpu.vector_store %arg9[%c0_78, %c0_79], %86 {strides = array<i32>} : memref<16x32xf32, #tpu.memory_space<vmem>>, vector<16x32xf32>,
    } else {
    }
    %c0 = arith.constant 0 : index
    %c0_1 = arith.constant 0 : index
    %c0_2 = arith.constant 0 : index
    %3 = vector.load %arg3[%c0, %c0_1, %c0_2] : memref<6x16x9xf32, #tpu.memory_space<vmem>>, vector<1x16x9xf32>
    %4 = vector.shape_cast %3 : vector<1x16x9xf32> to vector<16x9xf32>
    %c0_3 = arith.constant 0 : index
    %c0_4 = arith.constant 0 : index
    %5 = vector.load %arg4[%c0_3, %c0_4] : memref<9x32xf32, #tpu.memory_space<vmem>>, vector<9x32xf32>
    %cst = arith.constant dense<0.000000e+00> : vector<16x32xf32>
    %6 = tpu.matmul %4, %5, %cst {dimension_numbers = #tpu.dot_dimension_numbers<[1], [0], [0], [1], [0, 0, 1, 1], [], []>} : vector<16x9xf32>, vector<9x32xf32>, vector<16x32xf32> -> vector<16x32xf32>
    %c0_5 = arith.constant 0 : index
    %c0_6 = arith.constant 0 : index
    %7 = vector.load %arg5[%c0_5, %c0_6] : memref<1x32xf32, #tpu.memory_space<vmem>>, vector<1x32xf32>
    %8 = vector.broadcast %7 : vector<1x32xf32> to vector<16x32xf32>
    %9 = arith.addf %6, %8 : vector<16x32xf32>
    %cst_7 = arith.constant 0.000000e+00 : f32
    %10 = vector.broadcast %cst_7 : f32 to vector<16x32xf32>
    %11 = arith.maximumf %9, %10 : vector<16x32xf32>
    %c0_8 = arith.constant 0 : index
    %c0_9 = arith.constant 0 : index
    %c0_10 = arith.constant 0 : index
    %12 = vector.load %arg6[%c0_8, %c0_9, %c0_10] : memref<6x32x32xf32, #tpu.memory_space<vmem>>, vector<1x32x32xf32>
    %13 = vector.shape_cast %12 : vector<1x32x32xf32> to vector<32x32xf32>
    %cst_11 = arith.constant dense<0.000000e+00> : vector<16x32xf32>
    %14 = tpu.matmul %11, %13, %cst_11 {dimension_numbers = #tpu.dot_dimension_numbers<[1], [0], [0], [1], [0, 0, 1, 1], [], []>} : vector<16x32xf32>, vector<32x32xf32>, vector<16x32xf32> -> vector<16x32xf32>
    %c1 = arith.constant 1 : index
    %c0_12 = arith.constant 0 : index
    %c0_13 = arith.constant 0 : index
    %15 = vector.load %arg3[%c1, %c0_12, %c0_13] : memref<6x16x9xf32, #tpu.memory_space<vmem>>, vector<1x16x9xf32>
    %16 = vector.shape_cast %15 : vector<1x16x9xf32> to vector<16x9xf32>
    %c0_14 = arith.constant 0 : index
    %c0_15 = arith.constant 0 : index
    %17 = vector.load %arg4[%c0_14, %c0_15] : memref<9x32xf32, #tpu.memory_space<vmem>>, vector<9x32xf32>
    %cst_16 = arith.constant dense<0.000000e+00> : vector<16x32xf32>
    %18 = tpu.matmul %16, %17, %cst_16 {dimension_numbers = #tpu.dot_dimension_numbers<[1], [0], [0], [1], [0, 0, 1, 1], [], []>} : vector<16x9xf32>, vector<9x32xf32>, vector<16x32xf32> -> vector<16x32xf32>
    %c0_17 = arith.constant 0 : index
    %c0_18 = arith.constant 0 : index
    %19 = vector.load %arg5[%c0_17, %c0_18] : memref<1x32xf32, #tpu.memory_space<vmem>>, vector<1x32xf32>
    %20 = vector.broadcast %19 : vector<1x32xf32> to vector<16x32xf32>
    %21 = arith.addf %18, %20 : vector<16x32xf32>
    %cst_19 = arith.constant 0.000000e+00 : f32
    %22 = vector.broadcast %cst_19 : f32 to vector<16x32xf32>
    %23 = arith.maximumf %21, %22 : vector<16x32xf32>
    %c1_20 = arith.constant 1 : index
    %c0_21 = arith.constant 0 : index
    %c0_22 = arith.constant 0 : index
    %24 = vector.load %arg6[%c1_20, %c0_21, %c0_22] : memref<6x32x32xf32, #tpu.memory_space<vmem>>, vector<1x32x32xf32>
    %25 = vector.shape_cast %24 : vector<1x32x32xf32> to vector<32x32xf32>
    %cst_23 = arith.constant dense<0.000000e+00> : vector<16x32xf32>
    %26 = tpu.matmul %23, %25, %cst_23 {dimension_numbers = #tpu.dot_dimension_numbers<[1], [0], [0], [1], [0, 0, 1, 1], [], []>} : vector<16x32xf32>, vector<32x32xf32>, vector<16x32xf32> -> vector<16x32xf32>
    %27 = arith.addf %14, %26 : vector<16x32xf32>
    %c2 = arith.constant 2 : index
    %c0_24 = arith.constant 0 : index
    %c0_25 = arith.constant 0 : index
    %28 = vector.load %arg3[%c2, %c0_24, %c0_25] : memref<6x16x9xf32, #tpu.memory_space<vmem>>, vector<1x16x9xf32>
    %29 = vector.shape_cast %28 : vector<1x16x9xf32> to vector<16x9xf32>
    %c0_26 = arith.constant 0 : index
    %c0_27 = arith.constant 0 : index
    %30 = vector.load %arg4[%c0_26, %c0_27] : memref<9x32xf32, #tpu.memory_space<vmem>>, vector<9x32xf32>
    %cst_28 = arith.constant dense<0.000000e+00> : vector<16x32xf32>
    %31 = tpu.matmul %29, %30, %cst_28 {dimension_numbers = #tpu.dot_dimension_numbers<[1], [0], [0], [1], [0, 0, 1, 1], [], []>} : vector<16x9xf32>, vector<9x32xf32>, vector<16x32xf32> -> vector<16x32xf32>
    %c0_29 = arith.constant 0 : index
    %c0_30 = arith.constant 0 : index
    %32 = vector.load %arg5[%c0_29, %c0_30] : memref<1x32xf32, #tpu.memory_space<vmem>>, vector<1x32xf32>
    %33 = vector.broadcast %32 : vector<1x32xf32> to vector<16x32xf32>
    %34 = arith.addf %31, %33 : vector<16x32xf32>
    %cst_31 = arith.constant 0.000000e+00 : f32
    %35 = vector.broadcast %cst_31 : f32 to vector<16x32xf32>
    %36 = arith.maximumf %34, %35 : vector<16x32xf32>
    %c2_32 = arith.constant 2 : index
    %c0_33 = arith.constant 0 : index
    %c0_34 = arith.constant 0 : index
    %37 = vector.load %arg6[%c2_32, %c0_33, %c0_34] : memref<6x32x32xf32, #tpu.memory_space<vmem>>, vector<1x32x32xf32>
    %38 = vector.shape_cast %37 : vector<1x32x32xf32> to vector<32x32xf32>
    %cst_35 = arith.constant dense<0.000000e+00> : vector<16x32xf32>
    %39 = tpu.matmul %36, %38, %cst_35 {dimension_numbers = #tpu.dot_dimension_numbers<[1], [0], [0], [1], [0, 0, 1, 1], [], []>} : vector<16x32xf32>, vector<32x32xf32>, vector<16x32xf32> -> vector<16x32xf32>
    %40 = arith.addf %27, %39 : vector<16x32xf32>
    %c3 = arith.constant 3 : index
    %c0_36 = arith.constant 0 : index
    %c0_37 = arith.constant 0 : index
    %41 = vector.load %arg3[%c3, %c0_36, %c0_37] : memref<6x16x9xf32, #tpu.memory_space<vmem>>, vector<1x16x9xf32>
    %42 = vector.shape_cast %41 : vector<1x16x9xf32> to vector<16x9xf32>
    %c0_38 = arith.constant 0 : index
    %c0_39 = arith.constant 0 : index
    %43 = vector.load %arg4[%c0_38, %c0_39] : memref<9x32xf32, #tpu.memory_space<vmem>>, vector<9x32xf32>
    %cst_40 = arith.constant dense<0.000000e+00> : vector<16x32xf32>
    %44 = tpu.matmul %42, %43, %cst_40 {dimension_numbers = #tpu.dot_dimension_numbers<[1], [0], [0], [1], [0, 0, 1, 1], [], []>} : vector<16x9xf32>, vector<9x32xf32>, vector<16x32xf32> -> vector<16x32xf32>
    %c0_41 = arith.constant 0 : index
    %c0_42 = arith.constant 0 : index
    %45 = vector.load %arg5[%c0_41, %c0_42] : memref<1x32xf32, #tpu.memory_space<vmem>>, vector<1x32xf32>
    %46 = vector.broadcast %45 : vector<1x32xf32> to vector<16x32xf32>
    %47 = arith.addf %44, %46 : vector<16x32xf32>
    %cst_43 = arith.constant 0.000000e+00 : f32
    %48 = vector.broadcast %cst_43 : f32 to vector<16x32xf32>
    %49 = arith.maximumf %47, %48 : vector<16x32xf32>
    %c3_44 = arith.constant 3 : index
    %c0_45 = arith.constant 0 : index
    %c0_46 = arith.constant 0 : index
    %50 = vector.load %arg6[%c3_44, %c0_45, %c0_46] : memref<6x32x32xf32, #tpu.memory_space<vmem>>, vector<1x32x32xf32>
    %51 = vector.shape_cast %50 : vector<1x32x32xf32> to vector<32x32xf32>
    %cst_47 = arith.constant dense<0.000000e+00> : vector<16x32xf32>
    %52 = tpu.matmul %49, %51, %cst_47 {dimension_numbers = #tpu.dot_dimension_numbers<[1], [0], [0], [1], [0, 0, 1, 1], [], []>} : vector<16x32xf32>, vector<32x32xf32>, vector<16x32xf32> -> vector<16x32xf32>
    %53 = arith.addf %40, %52 : vector<16x32xf32>
    %c4 = arith.constant 4 : index
    %c0_48 = arith.constant 0 : index
    %c0_49 = arith.constant 0 : index
    %54 = vector.load %arg3[%c4, %c0_48, %c0_49] : memref<6x16x9xf32, #tpu.memory_space<vmem>>, vector<1x16x9xf32>
    %55 = vector.shape_cast %54 : vector<1x16x9xf32> to vector<16x9xf32>
    %c0_50 = arith.constant 0 : index
    %c0_51 = arith.constant 0 : index
    %56 = vector.load %arg4[%c0_50, %c0_51] : memref<9x32xf32, #tpu.memory_space<vmem>>, vector<9x32xf32>
    %cst_52 = arith.constant dense<0.000000e+00> : vector<16x32xf32>
    %57 = tpu.matmul %55, %56, %cst_52 {dimension_numbers = #tpu.dot_dimension_numbers<[1], [0], [0], [1], [0, 0, 1, 1], [], []>} : vector<16x9xf32>, vector<9x32xf32>, vector<16x32xf32> -> vector<16x32xf32>
    %c0_53 = arith.constant 0 : index
    %c0_54 = arith.constant 0 : index
    %58 = vector.load %arg5[%c0_53, %c0_54] : memref<1x32xf32, #tpu.memory_space<vmem>>, vector<1x32xf32>
    %59 = vector.broadcast %58 : vector<1x32xf32> to vector<16x32xf32>
    %60 = arith.addf %57, %59 : vector<16x32xf32>
    %cst_55 = arith.constant 0.000000e+00 : f32
    %61 = vector.broadcast %cst_55 : f32 to vector<16x32xf32>
    %62 = arith.maximumf %60, %61 : vector<16x32xf32>
    %c4_56 = arith.constant 4 : index
    %c0_57 = arith.constant 0 : index
    %c0_58 = arith.constant 0 : index
    %63 = vector.load %arg6[%c4_56, %c0_57, %c0_58] : memref<6x32x32xf32, #tpu.memory_space<vmem>>, vector<1x32x32xf32>
    %64 = vector.shape_cast %63 : vector<1x32x32xf32> to vector<32x32xf32>
    %cst_59 = arith.constant dense<0.000000e+00> : vector<16x32xf32>
    %65 = tpu.matmul %62, %64, %cst_59 {dimension_numbers = #tpu.dot_dimension_numbers<[1], [0], [0], [1], [0, 0, 1, 1], [], []>} : vector<16x32xf32>, vector<32x32xf32>, vector<16x32xf32> -> vector<16x32xf32>
    %66 = arith.addf %53, %65 : vector<16x32xf32>
    %c5 = arith.constant 5 : index
    %c0_60 = arith.constant 0 : index
    %c0_61 = arith.constant 0 : index
    %67 = vector.load %arg3[%c5, %c0_60, %c0_61] : memref<6x16x9xf32, #tpu.memory_space<vmem>>, vector<1x16x9xf32>
    %68 = vector.shape_cast %67 : vector<1x16x9xf32> to vector<16x9xf32>
    %c0_62 = arith.constant 0 : index
    %c0_63 = arith.constant 0 : index
    %69 = vector.load %arg4[%c0_62, %c0_63] : memref<9x32xf32, #tpu.memory_space<vmem>>, vector<9x32xf32>
    %cst_64 = arith.constant dense<0.000000e+00> : vector<16x32xf32>
    %70 = tpu.matmul %68, %69, %cst_64 {dimension_numbers = #tpu.dot_dimension_numbers<[1], [0], [0], [1], [0, 0, 1, 1], [], []>} : vector<16x9xf32>, vector<9x32xf32>, vector<16x32xf32> -> vector<16x32xf32>
    %c0_65 = arith.constant 0 : index
    %c0_66 = arith.constant 0 : index
    %71 = vector.load %arg5[%c0_65, %c0_66] : memref<1x32xf32, #tpu.memory_space<vmem>>, vector<1x32xf32>
    %72 = vector.broadcast %71 : vector<1x32xf32> to vector<16x32xf32>
    %73 = arith.addf %70, %72 : vector<16x32xf32>
    %cst_67 = arith.constant 0.000000e+00 : f32
    %74 = vector.broadcast %cst_67 : f32 to vector<16x32xf32>
    %75 = arith.maximumf %73, %74 : vector<16x32xf32>
    %c5_68 = arith.constant 5 : index
    %c0_69 = arith.constant 0 : index
    %c0_70 = arith.constant 0 : index
    %76 = vector.load %arg6[%c5_68, %c0_69, %c0_70] : memref<6x32x32xf32, #tpu.memory_space<vmem>>, vector<1x32x32xf32>
    %77 = vector.shape_cast %76 : vector<1x32x32xf32> to vector<32x32xf32>
    %cst_71 = arith.constant dense<0.000000e+00> : vector<16x32xf32>
    %78 = tpu.matmul %75, %77, %cst_71 {dimension_numbers = #tpu.dot_dimension_numbers<[1], [0], [0], [1], [0, 0, 1, 1], [], []>} : vector<16x32xf32>, vector<32x32xf32>, vector<16x32xf32> -> vector<16x32xf32>
    %79 = arith.addf %66, %78 : vector<16x32xf32>
    %c0_72 = arith.constant 0 : index
    %c0_73 = arith.constant 0 : index
    %80 = vector.load %arg9[%c0_72, %c0_73] : memref<16x32xf32, #tpu.memory_space<vmem>>, vector<16x32xf32>
    %81 = arith.addf %80, %79 : vector<16x32xf32>
    %c0_74 = arith.constant 0 : index
    %c0_75 = arith.constant 0 : index
    %82 = vector.load %arg9[%c0_74, %c0_75] : memref<16x32xf32, #tpu.memory_space<vmem>>, vector<16x32xf32>
    tpu.vector_store %arg9[%c0_74, %c0_75], %81 {strides = array<i32>} : memref<16x32xf32, #tpu.memory_space<vmem>>, vector<16x32xf32>,
    %c2_i32 = arith.constant 2 : i32
    %83 = arith.cmpi eq, %arg1, %c2_i32 : i32
    %84 = arith.extui %83 : i1 to i32
    %c0_i32_76 = arith.constant 0 : i32
    %85 = arith.cmpi ne, %84, %c0_i32_76 : i32
    scf.if %85 {
      %c0_77 = arith.constant 0 : index
      %c0_78 = arith.constant 0 : index
      %86 = vector.load %arg9[%c0_77, %c0_78] : memref<16x32xf32, #tpu.memory_space<vmem>>, vector<16x32xf32>
      %c0_79 = arith.constant 0 : index
      %c0_80 = arith.constant 0 : index
      %87 = vector.load %arg2[%c0_79, %c0_80] : memref<16x1xf32, #tpu.memory_space<vmem>>, vector<16x1xf32>
      %88 = vector.broadcast %87 : vector<16x1xf32> to vector<16x32xf32>
      %89 = arith.mulf %86, %88 : vector<16x32xf32>
      %c0_81 = arith.constant 0 : index
      %c0_82 = arith.constant 0 : index
      %90 = vector.load %arg7[%c0_81, %c0_82] : memref<1x32xf32, #tpu.memory_space<vmem>>, vector<1x32xf32>
      %91 = vector.broadcast %90 : vector<1x32xf32> to vector<16x32xf32>
      %92 = arith.addf %89, %91 : vector<16x32xf32>
      %c0_83 = arith.constant 0 : index
      %c0_84 = arith.constant 0 : index
      %93 = vector.load %arg8[%c0_83, %c0_84] : memref<16x32xf32, #tpu.memory_space<vmem>>, vector<16x32xf32>
      tpu.vector_store %arg8[%c0_83, %c0_84], %92 {strides = array<i32>} : memref<16x32xf32, #tpu.memory_space<vmem>>, vector<16x32xf32>,
    } else {
    }
    return
  }
  func.func @transform_0(%arg0: i32, %arg1: i32) -> (i32, i32) {
    %c0_i32 = arith.constant 0 : i32
    %c0_i32_0 = arith.constant 0 : i32
    return %arg0, %c0_i32 : i32, i32
  }
  func.func @transform_1(%arg0: i32, %arg1: i32) -> (i32, i32, i32) {
    %c0_i32 = arith.constant 0 : i32
    %c0_i32_0 = arith.constant 0 : i32
    return %arg1, %arg0, %c0_i32 : i32, i32, i32
  }
  func.func @transform_2(%arg0: i32, %arg1: i32) -> (i32, i32) {
    %c0_i32 = arith.constant 0 : i32
    %c0_i32_0 = arith.constant 0 : i32
    %c0_i32_1 = arith.constant 0 : i32
    return %c0_i32, %c0_i32_0 : i32, i32
  }
  func.func @transform_3(%arg0: i32, %arg1: i32) -> (i32, i32) {
    %c0_i32 = arith.constant 0 : i32
    %c0_i32_0 = arith.constant 0 : i32
    %c0_i32_1 = arith.constant 0 : i32
    return %c0_i32, %c0_i32_0 : i32, i32
  }
  func.func @transform_4(%arg0: i32, %arg1: i32) -> (i32, i32, i32) {
    %c0_i32 = arith.constant 0 : i32
    %c0_i32_0 = arith.constant 0 : i32
    %c0_i32_1 = arith.constant 0 : i32
    return %arg1, %c0_i32, %c0_i32_0 : i32, i32, i32
  }
  func.func @transform_5(%arg0: i32, %arg1: i32) -> (i32, i32) {
    %c0_i32 = arith.constant 0 : i32
    %c0_i32_0 = arith.constant 0 : i32
    %c0_i32_1 = arith.constant 0 : i32
    return %c0_i32, %c0_i32_0 : i32, i32
  }
  func.func @transform_6(%arg0: i32, %arg1: i32) -> (i32, i32) {
    %c0_i32 = arith.constant 0 : i32
    %c0_i32_0 = arith.constant 0 : i32
    return %arg0, %c0_i32 : i32, i32
  }
}

</mosaic_0001>

<llo_original>
// kernel: tpu_custom_call.1
$region0: #{tpu_custom_call.1}
  #allocation0 [shape = 'u32[]', space=smem, size = 0x4, offset = 0x4, fixed_abs, tag = 'smem constant byte address 0x4 - core index']
  #allocation1 [shape = 'u32[144,128]{1,0:T(1,128)}', space=vmem, size = 0x12000, scoped, tag = 'internal scratch']
  #allocation2 [shape = 'f32[16,32]{1,0:T(8,128)}', space=vmem, size = 0x2000, scoped, tag = 'scratch operand']
  %s0 = inlined_call_operand.vmem [shape: f32[32,1], index: 0, kind: input, shape index: {}]
  %s1 = inlined_call_operand.vmem [shape: f32[18,32,9], index: 1, kind: input, shape index: {}]
  %s2 = inlined_call_operand.vmem [shape: f32[9,32], index: 2, kind: input, shape index: {}]
  %s3 = inlined_call_operand.vmem [shape: f32[1,32], index: 3, kind: input, shape index: {}]
  %s4 = inlined_call_operand.vmem [shape: f32[18,32,32], index: 4, kind: input, shape index: {}]
  %s5 = inlined_call_operand.vmem [shape: f32[1,32], index: 5, kind: input, shape index: {}]
  %s6 = inlined_call_operand.hbm [shape: f32[32,32], index: 6, kind: output, shape index: {}]
  %s7 = sld [smem:[#allocation0]]
  $region103: #{tpu_custom_call.1} parent=0
    _
  %s9 = ssub.s32 1, %s7
  %s10 = scalar_select 0, %s9, %s7
  $region1: #{tpu_custom_call.1} parent=0
    #allocation3 [shape = 'u8[98304]{0}', space=vmem, size = 0x18000, scoped, tag = 'input window, operand 1']
    #allocation4 [shape = 'u8[16384]{0}', space=vmem, size = 0x4000, scoped, tag = 'output window, operand 0']
    #allocation5 [shape = 's32[2]{0}', space=sflag, size = 0x8, scoped, tag = 'scoped memory for tpu_custom_call.1']
    %11 = vsyncpa [#allocation5], 0
    %s12 = scalar_lea.sflag [#allocation5], 1
    %13 = vsyncpa %s12, 0
    loop: start=0, step=1, limit=8
    $region2: #{tpu_custom_call.1} parent=1 // loop_pre_header
      _
    $region3: #{tpu_custom_call.1} parent=1 // loop_header
      %s15 = sphi 0, %s19
      %p16 = scmp.ge.s32.totalorder %s15, 8
      %s22 = sphi 0, %s34
      %s23 = sphi 0, %s30
      %s24 = sphi 0, %s22
      %s25 = sphi 0, %s23
      %s26 = sphi 0, %s24
      %s27 = sphi 0, %s25
      %s37 = sphi 0, %s39
      %s40 = sphi 0, %s37
      %s41 = sphi 0, %s40
      %s57 = sphi 0, %s41
      %s65 = sphi 0, %s67
      %s68 = sphi 0, %s65
      %s69 = sphi 0, %s68
      %s85 = sphi 0, %s69
      %s89 = sphi 0, %s89
      %s91 = sphi 0, %s89
      %s92 = sphi 0, %s91
      %s106 = sphi 0, %s92
      %s110 = sphi 0, %s110
      %s112 = sphi 0, %s110
      %s113 = sphi 0, %s112
      %s127 = sphi 0, %s113
      %s133 = sphi 0, %s135
      %s136 = sphi 0, %s133
      %s137 = sphi 0, %s136
      %s153 = sphi 0, %s137
      %s157 = sphi 0, %s157
      %s159 = sphi 0, %s157
      %s160 = sphi 0, %s159
      %s174 = sphi 0, %s160
      %s180 = sphi 0, %s182
      %s183 = sphi 0, %s180
      %s184 = sphi 0, %s183
      %s200 = sphi 0, %s184
    $region4: #{tpu_custom_call.1} parent=1 // loop_header_branch
      %18 = sbr.rel (%p16) target = $region8
    $region5: #{tpu_custom_call.1} parent=1 // loop_body
      %s20 = ssub.s32 %s15, 1
      %s21 = ssub.s32 %s15, 2
      %s28 = sadd.s32 1, %s23
      %p29 = scmp.ge.s32.totalorder %s28, 3
      %s30 = scalar_select %p29, 0, %s28
      %s31 = sadd.s32 1, %s22
      %s32 = scalar_select %p29, %s31, %s22
      %p33 = scmp.ge.s32.totalorder %s32, 2
      %s34 = scalar_select %p33, 0, %s32
      %s35 = ssub.s32 %s22, %s34
      %p36 = scmp.eq.s32.totalorder %s35, 0
      %s38 = sadd.s32 %s37, 1
      %s39 = scalar_select %p36, %s37, %s38
      %p42 = pneg %p36
      %p43 = scmp.eq.s32.totalorder %s15, 5
      %p44 = por %p42, %p43
      %p45 = scmp.ne.s32.totalorder %s37, %s40
      %p46 = scmp.eq.s32.totalorder %s15, 0
      %p47 = por %p45, %p46
      %p48 = scmp.ne.s32.totalorder %s37, %s40
      %p49 = scmp.eq.s32.totalorder %s20, 5
      %p50 = por %p48, %p49
      %p51 = scmp.ne.s32.totalorder %s40, %s41
      %p52 = scmp.eq.s32.totalorder %s20, 0
      %p53 = por %p51, %p52
      %p54 = scmp.ne.s32.totalorder %s40, %s41
      %p55 = scmp.eq.s32.totalorder %s21, 5
      %p56 = por %p54, %p55
      %p58 = scmp.ne.s32.totalorder %s41, %s57
      %p59 = scmp.eq.s32.totalorder %s21, 0
      %p60 = por %p58, %p59
      %s61 = ssub.s32 %s23, %s30
      %s62 = ssub.s32 %s22, %s34
      %s63 = sor.u32 %s61, %s62
      %p64 = scmp.eq.s32.totalorder %s63, 0
      %s66 = sadd.s32 %s65, 1
      %s67 = scalar_select %p64, %s65, %s66
      %p70 = pneg %p64
      %p71 = scmp.eq.s32.totalorder %s15, 5
      %p72 = por %p70, %p71
      %p73 = scmp.ne.s32.totalorder %s65, %s68
      %p74 = scmp.eq.s32.totalorder %s15, 0
      %p75 = por %p73, %p74
      %p76 = scmp.ne.s32.totalorder %s65, %s68
      %p77 = scmp.eq.s32.totalorder %s20, 5
      %p78 = por %p76, %p77
      %p79 = scmp.ne.s32.totalorder %s68, %s69
      %p80 = scmp.eq.s32.totalorder %s20, 0
      %p81 = por %p79, %p80
      %p82 = scmp.ne.s32.totalorder %s68, %s69
      %p83 = scmp.eq.s32.totalorder %s21, 5
      %p84 = por %p82, %p83
      %p86 = scmp.ne.s32.totalorder %s69, %s85
      %p87 = scmp.eq.s32.totalorder %s21, 0
      %p88 = por %p86, %p87
      %s90 = sadd.s32 %s89, 1
      %p93 = scmp.eq.s32.totalorder %s15, 5
      %p94 = scmp.ne.s32.totalorder %s89, %s91
      %p95 = scmp.eq.s32.totalorder %s15, 0
      %p96 = por %p94, %p95
      %p97 = scmp.ne.s32.totalorder %s89, %s91
      %p98 = scmp.eq.s32.totalorder %s20, 5
      %p99 = por %p97, %p98
      %p100 = scmp.ne.s32.totalorder %s91, %s92
      %p101 = scmp.eq.s32.totalorder %s20, 0
      %p102 = por %p100, %p101
      %p103 = scmp.ne.s32.totalorder %s91, %s92
      %p104 = scmp.eq.s32.totalorder %s21, 5
      %p105 = por %p103, %p104
      %p107 = scmp.ne.s32.totalorder %s92, %s106
      %p108 = scmp.eq.s32.totalorder %s21, 0
      %p109 = por %p107, %p108
      %s111 = sadd.s32 %s110, 1
      %p114 = scmp.eq.s32.totalorder %s15, 5
      %p115 = scmp.ne.s32.totalorder %s110, %s112
      %p116 = scmp.eq.s32.totalorder %s15, 0
      %p117 = por %p115, %p116
      %p118 = scmp.ne.s32.totalorder %s110, %s112
      %p119 = scmp.eq.s32.totalorder %s20, 5
      %p120 = por %p118, %p119
      %p121 = scmp.ne.s32.totalorder %s112, %s113
      %p122 = scmp.eq.s32.totalorder %s20, 0
      %p123 = por %p121, %p122
      %p124 = scmp.ne.s32.totalorder %s112, %s113
      %p125 = scmp.eq.s32.totalorder %s21, 5
      %p126 = por %p124, %p125
      %p128 = scmp.ne.s32.totalorder %s113, %s127
      %p129 = scmp.eq.s32.totalorder %s21, 0
      %p130 = por %p128, %p129
      %s131 = ssub.s32 %s23, %s30
      %p132 = scmp.eq.s32.totalorder %s131, 0
      %s134 = sadd.s32 %s133, 1
      %s135 = scalar_select %p132, %s133, %s134
      %p138 = pneg %p132
      %p139 = scmp.eq.s32.totalorder %s15, 5
      %p140 = por %p138, %p139
      %p141 = scmp.ne.s32.totalorder %s133, %s136
      %p142 = scmp.eq.s32.totalorder %s15, 0
      %p143 = por %p141, %p142
      %p144 = scmp.ne.s32.totalorder %s133, %s136
      %p145 = scmp.eq.s32.totalorder %s20, 5
      %p146 = por %p144, %p145
      %p147 = scmp.ne.s32.totalorder %s136, %s137
      %p148 = scmp.eq.s32.totalorder %s20, 0
      %p149 = por %p147, %p148
      %p150 = scmp.ne.s32.totalorder %s136, %s137
      %p151 = scmp.eq.s32.totalorder %s21, 5
      %p152 = por %p150, %p151
      %p154 = scmp.ne.s32.totalorder %s137, %s153
      %p155 = scmp.eq.s32.totalorder %s21, 0
      %p156 = por %p154, %p155
      %s158 = sadd.s32 %s157, 1
      %p161 = scmp.eq.s32.totalorder %s15, 5
      %p162 = scmp.ne.s32.totalorder %s157, %s159
      %p163 = scmp.eq.s32.totalorder %s15, 0
      %p164 = por %p162, %p163
      %p165 = scmp.ne.s32.totalorder %s157, %s159
      %p166 = scmp.eq.s32.totalorder %s20, 5
      %p167 = por %p165, %p166
      %p168 = scmp.ne.s32.totalorder %s159, %s160
      %p169 = scmp.eq.s32.totalorder %s20, 0
      %p170 = por %p168, %p169
      %p171 = scmp.ne.s32.totalorder %s159, %s160
      %p172 = scmp.eq.s32.totalorder %s21, 5
      %p173 = por %p171, %p172
      %p175 = scmp.ne.s32.totalorder %s160, %s174
      %p176 = scmp.eq.s32.totalorder %s21, 0
      %p177 = por %p175, %p176
      %s178 = ssub.s32 %s22, %s34
      %p179 = scmp.eq.s32.totalorder %s178, 0
      %s181 = sadd.s32 %s180, 1
      %s182 = scalar_select %p179, %s180, %s181
      %p185 = pneg %p179
      %p186 = scmp.eq.s32.totalorder %s15, 5
      %p187 = por %p185, %p186
      %p188 = scmp.ne.s32.totalorder %s180, %s183
      %p189 = scmp.eq.s32.totalorder %s15, 0
      %p190 = por %p188, %p189
      %p191 = scmp.ne.s32.totalorder %s180, %s183
      %p192 = scmp.eq.s32.totalorder %s20, 5
      %p193 = por %p191, %p192
      %p194 = scmp.ne.s32.totalorder %s183, %s184
      %p195 = scmp.eq.s32.totalorder %s20, 0
      %p196 = por %p194, %p195
      %p197 = scmp.ne.s32.totalorder %s183, %s184
      %p198 = scmp.eq.s32.totalorder %s21, 5
      %p199 = por %p197, %p198
      %p201 = scmp.ne.s32.totalorder %s184, %s200
      %p202 = scmp.eq.s32.totalorder %s21, 0
      %p203 = por %p201, %p202
      %p204 = scmp.le.s32.totalorder 1, %s15
      %p205 = scmp.lt.s32.totalorder %s15, 7
      %p206 = pnand %p204, %p205
      %p207 = pneg %p206
      // Predicated region
      $region9: #{tpu_custom_call.1} parent=5 // pred_check
        _
      $region10: #{tpu_custom_call.1} parent=5 // pred_check_branch
        %209 = sbr.rel (%p206) target = $region12
      $region11: #{tpu_custom_call.1} parent=5 // pred_region
        %s210 = ssub.s32 %s15, 1
        // Predicated region
        $region13: #{tpu_custom_call.1} parent=11 // pred_check
          %p211 = pneg %p102
        $region14: #{tpu_custom_call.1} parent=11 // pred_check_branch
          %213 = sbr.rel (%p211) target = $region16
        $region15: #{tpu_custom_call.1} parent=11 // pred_region
          _
        $region16: #{tpu_custom_call.1} parent=11 // pred_fallthru
          _
        // Predicated region
        $region17: #{tpu_custom_call.1} parent=11 // pred_check
          %p214 = pneg %p123
        $region18: #{tpu_custom_call.1} parent=11 // pred_check_branch
          %216 = sbr.rel (%p214) target = $region20
        $region19: #{tpu_custom_call.1} parent=11 // pred_region
          _
        $region20: #{tpu_custom_call.1} parent=11 // pred_fallthru
          _
        // Predicated region
        $region21: #{tpu_custom_call.1} parent=11 // pred_check
          %p217 = pneg %p170
        $region22: #{tpu_custom_call.1} parent=11 // pred_check_branch
          %219 = sbr.rel (%p217) target = $region24
        $region23: #{tpu_custom_call.1} parent=11 // pred_region
          _
        $region24: #{tpu_custom_call.1} parent=11 // pred_fallthru
          _
      $region12: #{tpu_custom_call.1} parent=5 // pred_fallthru
        _
      %p220 = scmp.lt.s32.totalorder %s15, 6
      // Predicated region
      $region25: #{tpu_custom_call.1} parent=5 // pred_check
        %p221 = pneg %p220
      $region26: #{tpu_custom_call.1} parent=5 // pred_check_branch
        %223 = sbr.rel (%p221) target = $region28
      $region27: #{tpu_custom_call.1} parent=5 // pred_region
        // Predicated region
        $region29: #{tpu_custom_call.1} parent=27 // pred_check
          %p224 = pneg %p47
        $region30: #{tpu_custom_call.1} parent=27 // pred_check_branch
          %226 = sbr.rel (%p224) target = $region32
        $region31: #{tpu_custom_call.1} parent=27 // pred_region
          %s227 = smul.u32 2, %s22
          %p228 = scmp.lt.s32.totalorder %s227, 3
          %s229 = scalar_select %p228, %s227, 3
          %s230 = smul.addr %s229, 8
          %s231 = scalar_lea.vmem %s0, %s230
          %s232 = smul.u32 2, %s22
        $region32: #{tpu_custom_call.1} parent=27 // pred_fallthru
          _
        // Predicated region
        $region33: #{tpu_custom_call.1} parent=27 // pred_check
          %p233 = pneg %p75
        $region34: #{tpu_custom_call.1} parent=27 // pred_check_branch
          %235 = sbr.rel (%p233) target = $region36
        $region35: #{tpu_custom_call.1} parent=27 // pred_region
          %s236 = sand.u32 %s65, 1
          %s237 = sand.u32 %s65, 1
          %s238 = smul.addr %s237, 96
          %s239 = scalar_lea.vmem [#allocation3], %s238
          %s240 = smul.u32 6, %s23
          %s241 = smul.u32 2, %s22
          %s242 = smul.addr %s240, 4
          %s243 = sadd.s32 %s241, %s242
          %s244 = smul.addr %s243, 8
          %s245 = scalar_lea.vmem %s1, %s244
          // Predicated region
          $region37: #{tpu_custom_call.1} parent=35 // pred_check
            _
          $region38: #{tpu_custom_call.1} parent=35 // pred_check_branch
            %247 = sbr.rel (0) target = $region40
          $region39: #{tpu_custom_call.1} parent=35 // pred_region
            // Predicated region
            $region41: #{tpu_custom_call.1} parent=39 // pred_check
              _
            $region42: #{tpu_custom_call.1} parent=39 // pred_check_branch
              %249 = sbr.rel (0) target = $region44
            $region43: #{tpu_custom_call.1} parent=39 // pred_region
              // Predicated region
              $region56: #{tpu_custom_call.1} parent=43 // pred_check
                _
              $region57: #{tpu_custom_call.1} parent=43 // pred_check_branch
                %286 = sbr.rel (0) target = $region59
              $region58: #{tpu_custom_call.1} parent=43 // pred_region
                loop: start=0, step=1, limit=1
                $region60: #{tpu_custom_call.1} parent=58 // loop_pre_header
                  _
                $region61: #{tpu_custom_call.1} parent=58 // loop_header
                  %s288 = sphi 0, %s292
                  %p289 = scmp.ge.s32.totalorder %s288, 1
                  %s293 = sphi %s245, %s245
                  %s294 = sphi %s239, %s239
                $region62: #{tpu_custom_call.1} parent=58 // loop_header_branch
                  %291 = sbr.rel (%p289) target = $region66
                $region63: #{tpu_custom_call.1} parent=58 // loop_body
                  %v295 = vld [vmem:[%s293] sm:$0xff]
                  %296 = vst [vmem:[%s294] sm:$0xff] %v295
                  %v297 = vld [vmem:[%s293 + $0x8] sm:$0xff]
                  %298 = vst [vmem:[%s294 + $0x8] sm:$0xff] %v297
                  %v299 = vld [vmem:[%s293 + $0x20] sm:$0xff]
                  %300 = vst [vmem:[%s294 + $0x10] sm:$0xff] %v299
                  %v301 = vld [vmem:[%s293 + $0x28] sm:$0xff]
                  %302 = vst [vmem:[%s294 + $0x18] sm:$0xff] %v301
                  %v303 = vld [vmem:[%s293 + $0x40] sm:$0xff]
                  %304 = vst [vmem:[%s294 + $0x20] sm:$0xff] %v303
                  %v305 = vld [vmem:[%s293 + $0x48] sm:$0xff]
                  %306 = vst [vmem:[%s294 + $0x28] sm:$0xff] %v305
                  %v307 = vld [vmem:[%s293 + $0x60] sm:$0xff]
                  %308 = vst [vmem:[%s294 + $0x30] sm:$0xff] %v307
                  %v309 = vld [vmem:[%s293 + $0x68] sm:$0xff]
                  %310 = vst [vmem:[%s294 + $0x38] sm:$0xff] %v309
                  %v311 = vld [vmem:[%s293 + $0x80] sm:$0xff]
                  %312 = vst [vmem:[%s294 + $0x40] sm:$0xff] %v311
                  %v313 = vld [vmem:[%s293 + $0x88] sm:$0xff]
                  %314 = vst [vmem:[%s294 + $0x48] sm:$0xff] %v313
                  %v315 = vld [vmem:[%s293 + $0xa0] sm:$0xff]
                  %316 = vst [vmem:[%s294 + $0x50] sm:$0xff] %v315
                  %v317 = vld [vmem:[%s293 + $0xa8] sm:$0xff]
                  %318 = vst [vmem:[%s294 + $0x58] sm:$0xff] %v317
                $region64: #{tpu_custom_call.1} parent=58 // loop_footer
                  %s292 = sadd.s32 1, %s288
                $region65: #{tpu_custom_call.1} parent=58 // loop_footer_branch
                  %287 = sbr.rel target = $region61
                $region66: #{tpu_custom_call.1} parent=58 // loop_exit
                  _
              $region59: #{tpu_custom_call.1} parent=43 // pred_fallthru
                _
              // Predicated region
              $region67: #{tpu_custom_call.1} parent=43 // pred_check
                _
              $region68: #{tpu_custom_call.1} parent=43 // pred_check_branch
                %320 = sbr.rel target = $region70
              $region69: #{tpu_custom_call.1} parent=43 // pred_region
                _
              $region70: #{tpu_custom_call.1} parent=43 // pred_fallthru
                _
            $region44: #{tpu_custom_call.1} parent=39 // pred_fallthru
              _
            // Predicated region
            $region45: #{tpu_custom_call.1} parent=39 // pred_check
              _
            $region46: #{tpu_custom_call.1} parent=39 // pred_check_branch
              %251 = sbr.rel target = $region48
            $region47: #{tpu_custom_call.1} parent=39 // pred_region
              loop: start=0, step=1, limit=1
              $region49: #{tpu_custom_call.1} parent=47 // loop_pre_header
                _
              $region50: #{tpu_custom_call.1} parent=47 // loop_header
                %s254 = sphi 0, %s258
                %p255 = scmp.ge.s32.totalorder %s254, 1
                %s259 = sphi %s245, %s245
                %s260 = sphi %s239, %s239
              $region51: #{tpu_custom_call.1} parent=47 // loop_header_branch
                %257 = sbr.rel (%p255) target = $region55
              $region52: #{tpu_custom_call.1} parent=47 // loop_body
                %v261 = vld [vmem:[%s259] sm:$0xff]
                %262 = vst [vmem:[%s260] sm:$0xff] %v261
                %v263 = vld [vmem:[%s259 + $0x8] sm:$0xff]
                %264 = vst [vmem:[%s260 + $0x8] sm:$0xff] %v263
                %v265 = vld [vmem:[%s259 + $0x20] sm:$0xff]
                %266 = vst [vmem:[%s260 + $0x10] sm:$0xff] %v265
                %v267 = vld [vmem:[%s259 + $0x28] sm:$0xff]
                %268 = vst [vmem:[%s260 + $0x18] sm:$0xff] %v267
                %v269 = vld [vmem:[%s259 + $0x40] sm:$0xff]
                %270 = vst [vmem:[%s260 + $0x20] sm:$0xff] %v269
                %v271 = vld [vmem:[%s259 + $0x48] sm:$0xff]
                %272 = vst [vmem:[%s260 + $0x28] sm:$0xff] %v271
                %v273 = vld [vmem:[%s259 + $0x60] sm:$0xff]
                %274 = vst [vmem:[%s260 + $0x30] sm:$0xff] %v273
                %v275 = vld [vmem:[%s259 + $0x68] sm:$0xff]
                %276 = vst [vmem:[%s260 + $0x38] sm:$0xff] %v275
                %v277 = vld [vmem:[%s259 + $0x80] sm:$0xff]
                %278 = vst [vmem:[%s260 + $0x40] sm:$0xff] %v277
                %v279 = vld [vmem:[%s259 + $0x88] sm:$0xff]
                %280 = vst [vmem:[%s260 + $0x48] sm:$0xff] %v279
                %v281 = vld [vmem:[%s259 + $0xa0] sm:$0xff]
                %282 = vst [vmem:[%s260 + $0x50] sm:$0xff] %v281
                %v283 = vld [vmem:[%s259 + $0xa8] sm:$0xff]
                %284 = vst [vmem:[%s260 + $0x58] sm:$0xff] %v283
              $region53: #{tpu_custom_call.1} parent=47 // loop_footer
                %s258 = sadd.s32 1, %s254
              $region54: #{tpu_custom_call.1} parent=47 // loop_footer_branch
                %253 = sbr.rel target = $region50
              $region55: #{tpu_custom_call.1} parent=47 // loop_exit
                _
            $region48: #{tpu_custom_call.1} parent=39 // pred_fallthru
              _
          $region40: #{tpu_custom_call.1} parent=35 // pred_fallthru
            _
          %321 = vnop
        $region36: #{tpu_custom_call.1} parent=27 // pred_fallthru
          _
        // Predicated region
        $region71: #{tpu_custom_call.1} parent=27 // pred_check
          %p322 = pneg %p143
        $region72: #{tpu_custom_call.1} parent=27 // pred_check_branch
          %324 = sbr.rel (%p322) target = $region74
        $region73: #{tpu_custom_call.1} parent=27 // pred_region
          %s325 = smul.u32 6, %s23
          %p326 = scmp.lt.s32.totalorder %s325, 17
          %s327 = scalar_select %p326, %s325, 17
          %s328 = smul.addr %s327, 4
          %s329 = smul.addr %s328, 8
          %s330 = scalar_lea.vmem %s4, %s329
          %s331 = smul.u32 6, %s23
        $region74: #{tpu_custom_call.1} parent=27 // pred_fallthru
          _
      $region28: #{tpu_custom_call.1} parent=5 // pred_fallthru
        _
      %p332 = scmp.le.s32.totalorder 1, %s15
      %p333 = scmp.lt.s32.totalorder %s15, 7
      %p334 = pnand %p332, %p333
      %p335 = pneg %p334
      // Predicated region
      $region75: #{tpu_custom_call.1} parent=5 // pred_check
        _
      $region76: #{tpu_custom_call.1} parent=5 // pred_check_branch
        %337 = sbr.rel (%p334) target = $region78
      $region77: #{tpu_custom_call.1} parent=5 // pred_region
        %s338 = ssub.s32 %s15, 1
        %s339 = sand.u32 %s68, 1
        %s340 = sand.u32 %s68, 1
        %s341 = smul.addr %s340, 96
        %s342 = scalar_lea.vmem [#allocation3], %s341
        // Predicated region
        $region79: #{tpu_custom_call.1} parent=77 // pred_check
          %p343 = pneg %p81
        $region80: #{tpu_custom_call.1} parent=77 // pred_check_branch
          %345 = sbr.rel (%p343) target = $region82
        $region81: #{tpu_custom_call.1} parent=77 // pred_region
          _
        $region82: #{tpu_custom_call.1} parent=77 // pred_fallthru
          _
        %s346 = smul.u32 2, %s24
        %p347 = scmp.lt.s32.totalorder %s346, 3
        %s348 = scalar_select %p347, %s346, 3
        %s349 = smul.addr %s348, 8
        %s350 = scalar_lea.vmem %s0, %s349
        %p351 = pneg %p53
        %p352 = pneg %p50
        %s353 = sand.u32 %s68, 1
        %s354 = sand.u32 %s68, 1
        %s355 = smul.addr %s354, 96
        %s356 = scalar_lea.vmem [#allocation3], %s355
        %p357 = pneg %p81
        %p358 = pneg %p78
        %p359 = pneg %p102
        %p360 = pneg %p99
        %p361 = pneg %p123
        %p362 = pneg %p120
        %s363 = smul.u32 6, %s25
        %p364 = scmp.lt.s32.totalorder %s363, 17
        %s365 = scalar_select %p364, %s363, 17
        %s366 = smul.addr %s365, 4
        %s367 = smul.addr %s366, 8
        %s368 = scalar_lea.vmem %s4, %s367
        %p369 = pneg %p149
        %p370 = pneg %p146
        %p371 = pneg %p170
        %p372 = pneg %p167
        %p373 = pneg %p196
        %p374 = pneg %p193
        %s375 = sand.u32 %s183, 1
        %s376 = scalar_lea.sflag [#allocation5], %s375
        %s377 = sand.u32 %s183, 1
        %s378 = smul.addr %s377, 16
        %s379 = scalar_lea.vmem [#allocation4], %s378
        %s380 = smul.u32 2, %s24
        %p381 = scmp.lt.s32.totalorder %s380, 3
        %s382 = scalar_select %p381, %s380, 3
        %s383 = smul.addr %s382, 8
        %s384 = scalar_lea.vmem %s0, %s383
        %s385 = smul.u32 2, %s24
        %s386 = smul.u32 6, %s25
        %s387 = smul.u32 2, %s24
        %s388 = smul.u32 6, %s25
        %p389 = scmp.lt.s32.totalorder %s388, 17
        %s390 = scalar_select %p389, %s388, 17
        %s391 = smul.addr %s390, 4
        %s392 = smul.addr %s391, 8
        %s393 = scalar_lea.vmem %s4, %s392
        %s394 = smul.u32 6, %s25
        %s395 = smul.u32 2, %s24
        %p396 = scmp.eq.s32.totalorder %s25, 0
        // Predicated region
        $region83: #{tpu_custom_call.1} parent=77 // pred_check
          %p397 = pneg %p396
        $region84: #{tpu_custom_call.1} parent=77 // pred_check_branch
          %399 = sbr.rel (%p397) target = $region86
        $region85: #{tpu_custom_call.1} parent=77 // pred_region
          %vm400 = vcmask 261120
          %401 = vst.msk [vmem:[#allocation2] sm:$0xff] %vm400, 0.0
          %402 = vst.msk [vmem:[#allocation2 + $0x8] sm:$0xff] %vm400, 0.0
        $region86: #{tpu_custom_call.1} parent=77 // pred_fallthru
          _
        %v403 = vld [vmem:[%s342] sm:$0xff]
        %v404 = vld [vmem:[%s342 + $0x8] sm:$0xff]
        %v405 = vld [vmem:[%s2] sm:$0xff]
        %v406 = vld [vmem:[%s2 + $0x8] sm:$0x1]
        %v407 = vld [vmem:[%s3] sm:$0x1]
        %v409 = vlaneseq
        %v410 = vshrl.u32 %v409, 7
        %v411 = vsub.s32 0, %v410
        %v412 = vrot.slane %v407, %v411
        %vm414 = vcmask 72704
        %v416 = vsel %vm414, %v403, 0
        %v419 = vsel %vm414, %v404, 0
        %vm421 = vcmask 1040384
        %v423 = vsel %vm421, %v406, 0
        %425 = vmatprep.subr.mxu0 0.0
        %426 = vmatpush1.msra.mxu0 %v405
        %427 = vmatprep.subr.mxu0 0.0
        %428 = vmatpush1.msra.mxu0 %v423
        %429 = vmatprep.subr.mxu0 0.0
        %430 = vmatpush1.msra.mxu0 0.0
        %431 = vmatprep.subr.mxu0 0.0
        %432 = vmatpush1.msra.mxu0 0.0
        %433 = vmatprep.subr.mxu0 0.0
        %434 = vmatpush1.msra.mxu0 0.0
        %435 = vmatprep.subr.mxu0 0.0
        %436 = vmatpush1.msra.mxu0 0.0
        %437 = vmatprep.subr.mxu0 0.0
        %438 = vmatpush1.msra.mxu0 0.0
        %439 = vmatprep.subr.mxu0 0.0
        %440 = vmatpush1.msra.mxu0 0.0
        %441 = vmatprep.subr.mxu0 0.0
        %442 = vmatpush1.msra.mxu0 0.0
        %443 = vmatprep.subr.mxu0 0.0
        %444 = vmatpush1.msra.mxu0 0.0
        %445 = vmatprep.subr.mxu0 0.0
        %446 = vmatpush1.msra.mxu0 0.0
        %447 = vmatprep.subr.mxu0 0.0
        %448 = vmatpush1.msra.mxu0 0.0
        %449 = vmatprep.subr.mxu0 0.0
        %450 = vmatpush1.msra.mxu0 0.0
        %451 = vmatprep.subr.mxu0 0.0
        %452 = vmatpush1.msra.mxu0 0.0
        %453 = vmatprep.subr.mxu0 0.0
        %454 = vmatpush1.msra.mxu0 0.0
        %455 = vmatprep.subr.mxu0 0.0
        %456 = vmatpush1.msra.mxu0 0.0
        %457 = vmatprep.subr.mxu0 0.0
        %458 = vmatpush1.msra.mxu0 0.0
        %459 = vmatprep.subr.mxu0 0.0
        %460 = vmatpush1.msra.mxu0 0.0
        %461 = vmatprep.subr.mxu0 0.0
        %462 = vmatpush1.msra.mxu0 0.0
        %463 = vmatprep.subr.mxu0 0.0
        %464 = vmatpush1.msra.mxu0 0.0
        %465 = vmatprep.subr.mxu0 0.0
        %466 = vmatpush1.msra.mxu0 0.0
        %467 = vmatprep.subr.mxu0 0.0
        %468 = vmatpush1.msra.mxu0 0.0
        %469 = vmatprep.subr.mxu0 0.0
        %470 = vmatpush1.msra.mxu0 0.0
        %471 = vmatprep.subr.mxu0 0.0
        %472 = vmatpush1.msra.mxu0 0.0
        %473 = vmatprep.subr.mxu0 0.0
        %474 = vmatpush1.msra.mxu0 0.0
        %475 = vmatprep.subr.mxu0 0.0
        %476 = vmatpush1.msra.mxu0 0.0
        %477 = vmatprep.subr.mxu0 0.0
        %478 = vmatpush1.msra.mxu0 0.0
        %479 = vmatprep.subr.mxu0 0.0
        %480 = vmatpush1.msra.mxu0 0.0
        %481 = vmatprep.subr.mxu0 0.0
        %482 = vmatpush1.msra.mxu0 0.0
        %483 = vmatprep.subr.mxu0 0.0
        %484 = vmatpush1.msra.mxu0 0.0
        %485 = vmatprep.subr.mxu0 0.0
        %486 = vmatpush1.msra.mxu0 0.0
        %487 = vmatprep.subr.mxu0 0.0
        %488 = vmatpush1.msra.mxu0 0.0
        %489 = vmatprep.mubr.f32.mxu0 0.0
        %490 = vmatmul.mubr.f32.gmra.mrb[0].mxu0 %v416
        %v491 = vpop.f32.mrb[0].mxu0
        %v492 = vadd.f32 %v412, %v491
        %v493 = vpop.f32.mrb[0].mxu0
        %494 = vmatprep.mubr.f32.mxu0 0.0
        %495 = vmatmul.mubr.f32.gmra.mrb[0].mxu0 %v419
        %v496 = vpop.f32.mrb[0].mxu0
        %v497 = vadd.f32 %v412, %v496
        %v498 = vpop.f32.mrb[0].mxu0
        %499 = vdwg.mxu0
        %v500 = vmax.f32 %v492, 0.0
        %v501 = vmax.f32 %v497, 0.0
        %v502 = vld [vmem:[%s393] sm:$0xff]
        %v503 = vld [vmem:[%s393 + $0x8] sm:$0xff]
        %v504 = vld [vmem:[%s393 + $0x10] sm:$0xff]
        %v505 = vld [vmem:[%s393 + $0x18] sm:$0xff]
        %s506 = scalar_lea.vmem %s342, 16 [#allocation3]
        %v507 = vld [vmem:[%s506] sm:$0xff]
        %v508 = vld [vmem:[%s506 + $0x8] sm:$0xff]
        %v510 = vsel %vm414, %v507, 0
        %v513 = vsel %vm414, %v508, 0
        %515 = vmatprep.subr.mxu0 0.0
        %516 = vmatpush1.msra.mxu0 %v405
        %517 = vmatprep.subr.mxu0 0.0
        %518 = vmatpush1.msra.mxu0 %v423
        %519 = vmatprep.subr.mxu0 0.0
        %520 = vmatpush1.msra.mxu0 0.0
        %521 = vmatprep.subr.mxu0 0.0
        %522 = vmatpush1.msra.mxu0 0.0
        %523 = vmatprep.subr.mxu0 0.0
        %524 = vmatpush1.msra.mxu0 0.0
        %525 = vmatprep.subr.mxu0 0.0
        %526 = vmatpush1.msra.mxu0 0.0
        %527 = vmatprep.subr.mxu0 0.0
        %528 = vmatpush1.msra.mxu0 0.0
        %529 = vmatprep.subr.mxu0 0.0
        %530 = vmatpush1.msra.mxu0 0.0
        %531 = vmatprep.subr.mxu0 0.0
        %532 = vmatpush1.msra.mxu0 0.0
        %533 = vmatprep.subr.mxu0 0.0
        %534 = vmatpush1.msra.mxu0 0.0
        %535 = vmatprep.subr.mxu0 0.0
        %536 = vmatpush1.msra.mxu0 0.0
        %537 = vmatprep.subr.mxu0 0.0
        %538 = vmatpush1.msra.mxu0 0.0
        %539 = vmatprep.subr.mxu0 0.0
        %540 = vmatpush1.msra.mxu0 0.0
        %541 = vmatprep.subr.mxu0 0.0
        %542 = vmatpush1.msra.mxu0 0.0
        %543 = vmatprep.subr.mxu0 0.0
        %544 = vmatpush1.msra.mxu0 0.0
        %545 = vmatprep.subr.mxu0 0.0
        %546 = vmatpush1.msra.mxu0 0.0
        %547 = vmatprep.subr.mxu0 0.0
        %548 = vmatpush1.msra.mxu0 0.0
        %549 = vmatprep.subr.mxu0 0.0
        %550 = vmatpush1.msra.mxu0 0.0
        %551 = vmatprep.subr.mxu0 0.0
        %552 = vmatpush1.msra.mxu0 0.0
        %553 = vmatprep.subr.mxu0 0.0
        %554 = vmatpush1.msra.mxu0 0.0
        %555 = vmatprep.subr.mxu0 0.0
        %556 = vmatpush1.msra.mxu0 0.0
        %557 = vmatprep.subr.mxu0 0.0
        %558 = vmatpush1.msra.mxu0 0.0
        %559 = vmatprep.subr.mxu0 0.0
        %560 = vmatpush1.msra.mxu0 0.0
        %561 = vmatprep.subr.mxu0 0.0
        %562 = vmatpush1.msra.mxu0 0.0
        %563 = vmatprep.subr.mxu0 0.0
        %564 = vmatpush1.msra.mxu0 0.0
        %565 = vmatprep.subr.mxu0 0.0
        %566 = vmatpush1.msra.mxu0 0.0
        %567 = vmatprep.subr.mxu0 0.0
        %568 = vmatpush1.msra.mxu0 0.0
        %569 = vmatprep.subr.mxu0 0.0
        %570 = vmatpush1.msra.mxu0 0.0
        %571 = vmatprep.subr.mxu0 0.0
        %572 = vmatpush1.msra.mxu0 0.0
        %573 = vmatprep.subr.mxu0 0.0
        %574 = vmatpush1.msra.mxu0 0.0
        %575 = vmatprep.subr.mxu0 0.0
        %576 = vmatpush1.msra.mxu0 0.0
        %577 = vmatprep.subr.mxu0 0.0
        %578 = vmatpush1.msra.mxu0 0.0
        %579 = vmatprep.mubr.f32.mxu0 0.0
        %580 = vmatmul.mubr.f32.gmra.mrb[0].mxu0 %v510
        %v581 = vpop.f32.mrb[0].mxu0
        %v582 = vadd.f32 %v412, %v581
        %v583 = vpop.f32.mrb[0].mxu0
        %584 = vmatprep.mubr.f32.mxu0 0.0
        %585 = vmatmul.mubr.f32.gmra.mrb[0].mxu0 %v513
        %v586 = vpop.f32.mrb[0].mxu0
        %v587 = vadd.f32 %v412, %v586
        %v588 = vpop.f32.mrb[0].mxu0
        %589 = vdwg.mxu0
        %v590 = vmax.f32 %v582, 0.0
        %v591 = vmax.f32 %v587, 0.0
        %s592 = scalar_lea.vmem %s393, 32
        %v593 = vld [vmem:[%s592] sm:$0xff]
        %v594 = vld [vmem:[%s592 + $0x8] sm:$0xff]
        %v595 = vld [vmem:[%s592 + $0x10] sm:$0xff]
        %v596 = vld [vmem:[%s592 + $0x18] sm:$0xff]
        %vm597 = vcmask 261120
        %v599 = vsel %vm597, %v590, 0
        %v602 = vsel %vm597, %v591, 0
        %604 = vmatprep.subr.mxu0 0.0
        %605 = vmatpush1.msra.mxu0 %v593
        %606 = vmatprep.subr.mxu0 0.0
        %607 = vmatpush1.msra.mxu0 %v594
        %608 = vmatprep.subr.mxu0 0.0
        %609 = vmatpush1.msra.mxu0 %v595
        %610 = vmatprep.subr.mxu0 0.0
        %611 = vmatpush1.msra.mxu0 %v596
        %612 = vmatprep.subr.mxu0 0.0
        %613 = vmatpush1.msra.mxu0 0.0
        %614 = vmatprep.subr.mxu0 0.0
        %615 = vmatpush1.msra.mxu0 0.0
        %616 = vmatprep.subr.mxu0 0.0
        %617 = vmatpush1.msra.mxu0 0.0
        %618 = vmatprep.subr.mxu0 0.0
        %619 = vmatpush1.msra.mxu0 0.0
        %620 = vmatprep.subr.mxu0 0.0
        %621 = vmatpush1.msra.mxu0 0.0
        %622 = vmatprep.subr.mxu0 0.0
        %623 = vmatpush1.msra.mxu0 0.0
        %624 = vmatprep.subr.mxu0 0.0
        %625 = vmatpush1.msra.mxu0 0.0
        %626 = vmatprep.subr.mxu0 0.0
        %627 = vmatpush1.msra.mxu0 0.0
        %628 = vmatprep.subr.mxu0 0.0
        %629 = vmatpush1.msra.mxu0 0.0
        %630 = vmatprep.subr.mxu0 0.0
        %631 = vmatpush1.msra.mxu0 0.0
        %632 = vmatprep.subr.mxu0 0.0
        %633 = vmatpush1.msra.mxu0 0.0
        %634 = vmatprep.subr.mxu0 0.0
        %635 = vmatpush1.msra.mxu0 0.0
        %636 = vmatprep.subr.mxu0 0.0
        %637 = vmatpush1.msra.mxu0 0.0
        %638 = vmatprep.subr.mxu0 0.0
        %639 = vmatpush1.msra.mxu0 0.0
        %640 = vmatprep.subr.mxu0 0.0
        %641 = vmatpush1.msra.mxu0 0.0
        %642 = vmatprep.subr.mxu0 0.0
        %643 = vmatpush1.msra.mxu0 0.0
        %644 = vmatprep.subr.mxu0 0.0
        %645 = vmatpush1.msra.mxu0 0.0
        %646 = vmatprep.subr.mxu0 0.0
        %647 = vmatpush1.msra.mxu0 0.0
        %648 = vmatprep.subr.mxu0 0.0
        %649 = vmatpush1.msra.mxu0 0.0
        %650 = vmatprep.subr.mxu0 0.0
        %651 = vmatpush1.msra.mxu0 0.0
        %652 = vmatprep.subr.mxu0 0.0
        %653 = vmatpush1.msra.mxu0 0.0
        %654 = vmatprep.subr.mxu0 0.0
        %655 = vmatpush1.msra.mxu0 0.0
        %656 = vmatprep.subr.mxu0 0.0
        %657 = vmatpush1.msra.mxu0 0.0
        %658 = vmatprep.subr.mxu0 0.0
        %659 = vmatpush1.msra.mxu0 0.0
        %660 = vmatprep.subr.mxu0 0.0
        %661 = vmatpush1.msra.mxu0 0.0
        %662 = vmatprep.subr.mxu0 0.0
        %663 = vmatpush1.msra.mxu0 0.0
        %664 = vmatprep.subr.mxu0 0.0
        %665 = vmatpush1.msra.mxu0 0.0
        %666 = vmatprep.subr.mxu0 0.0
        %667 = vmatpush1.msra.mxu0 0.0
        %668 = vmatprep.mubr.f32.mxu0 0.0
        %669 = vmatmul.mubr.f32.gmra.mrb[0].mxu0 %v599
        %v670 = vpop.f32.mrb[0].mxu0
        %v671 = vadd.f32 0.0, %v670
        %v672 = vpop.f32.mrb[0].mxu0
        %673 = vmatprep.mubr.f32.mxu0 0.0
        %674 = vmatmul.mubr.f32.gmra.mrb[0].mxu0 %v602
        %v675 = vpop.f32.mrb[0].mxu0
        %v676 = vadd.f32 0.0, %v675
        %v677 = vpop.f32.mrb[0].mxu0
        %678 = vdwg.mxu0
        %v680 = vsel %vm597, %v500, 0
        %v683 = vsel %vm597, %v501, 0
        %685 = vmatprep.subr.mxu0 0.0
        %686 = vmatpush1.msra.mxu0 %v502
        %687 = vmatprep.subr.mxu0 0.0
        %688 = vmatpush1.msra.mxu0 %v503
        %689 = vmatprep.subr.mxu0 0.0
        %690 = vmatpush1.msra.mxu0 %v504
        %691 = vmatprep.subr.mxu0 0.0
        %692 = vmatpush1.msra.mxu0 %v505
        %693 = vmatprep.subr.mxu0 0.0
        %694 = vmatpush1.msra.mxu0 0.0
        %695 = vmatprep.subr.mxu0 0.0
        %696 = vmatpush1.msra.mxu0 0.0
        %697 = vmatprep.subr.mxu0 0.0
        %698 = vmatpush1.msra.mxu0 0.0
        %699 = vmatprep.subr.mxu0 0.0
        %700 = vmatpush1.msra.mxu0 0.0
        %701 = vmatprep.subr.mxu0 0.0
        %702 = vmatpush1.msra.mxu0 0.0
        %703 = vmatprep.subr.mxu0 0.0
        %704 = vmatpush1.msra.mxu0 0.0
        %705 = vmatprep.subr.mxu0 0.0
        %706 = vmatpush1.msra.mxu0 0.0
        %707 = vmatprep.subr.mxu0 0.0
        %708 = vmatpush1.msra.mxu0 0.0
        %709 = vmatprep.subr.mxu0 0.0
        %710 = vmatpush1.msra.mxu0 0.0
        %711 = vmatprep.subr.mxu0 0.0
        %712 = vmatpush1.msra.mxu0 0.0
        %713 = vmatprep.subr.mxu0 0.0
        %714 = vmatpush1.msra.mxu0 0.0
        %715 = vmatprep.subr.mxu0 0.0
        %716 = vmatpush1.msra.mxu0 0.0
        %717 = vmatprep.subr.mxu0 0.0
        %718 = vmatpush1.msra.mxu0 0.0
        %719 = vmatprep.subr.mxu0 0.0
        %720 = vmatpush1.msra.mxu0 0.0
        %721 = vmatprep.subr.mxu0 0.0
        %722 = vmatpush1.msra.mxu0 0.0
        %723 = vmatprep.subr.mxu0 0.0
        %724 = vmatpush1.msra.mxu0 0.0
        %725 = vmatprep.subr.mxu0 0.0
        %726 = vmatpush1.msra.mxu0 0.0
        %727 = vmatprep.subr.mxu0 0.0
        %728 = vmatpush1.msra.mxu0 0.0
        %729 = vmatprep.subr.mxu0 0.0
        %730 = vmatpush1.msra.mxu0 0.0
        %731 = vmatprep.subr.mxu0 0.0
        %732 = vmatpush1.msra.mxu0 0.0
        %733 = vmatprep.subr.mxu0 0.0
        %734 = vmatpush1.msra.mxu0 0.0
        %735 = vmatprep.subr.mxu0 0.0
        %736 = vmatpush1.msra.mxu0 0.0
        %737 = vmatprep.subr.mxu0 0.0
        %738 = vmatpush1.msra.mxu0 0.0
        %739 = vmatprep.subr.mxu0 0.0
        %740 = vmatpush1.msra.mxu0 0.0
        %741 = vmatprep.subr.mxu0 0.0
        %742 = vmatpush1.msra.mxu0 0.0
        %743 = vmatprep.subr.mxu0 0.0
        %744 = vmatpush1.msra.mxu0 0.0
        %745 = vmatprep.subr.mxu0 0.0
        %746 = vmatpush1.msra.mxu0 0.0
        %747 = vmatprep.subr.mxu0 0.0
        %748 = vmatpush1.msra.mxu0 0.0
        %749 = vmatprep.mubr.f32.mxu0 0.0
        %750 = vmatmul.mubr.f32.gmra.mrb[0].mxu0 %v680
        %v751 = vpop.f32.mrb[0].mxu0
        %v752 = vadd.f32 %v671, %v751
        %v753 = vpop.f32.mrb[0].mxu0
        %754 = vmatprep.mubr.f32.mxu0 0.0
        %755 = vmatmul.mubr.f32.gmra.mrb[0].mxu0 %v683
        %v756 = vpop.f32.mrb[0].mxu0
        %v757 = vadd.f32 %v676, %v756
        %v758 = vpop.f32.mrb[0].mxu0
        %759 = vdwg.mxu0
        %s760 = scalar_lea.vmem %s342, 32 [#allocation3]
        %v761 = vld [vmem:[%s760] sm:$0xff]
        %v762 = vld [vmem:[%s760 + $0x8] sm:$0xff]
        %v764 = vsel %vm414, %v761, 0
        %v767 = vsel %vm414, %v762, 0
        %769 = vmatprep.subr.mxu0 0.0
        %770 = vmatpush1.msra.mxu0 %v405
        %771 = vmatprep.subr.mxu0 0.0
        %772 = vmatpush1.msra.mxu0 %v423
        %773 = vmatprep.subr.mxu0 0.0
        %774 = vmatpush1.msra.mxu0 0.0
        %775 = vmatprep.subr.mxu0 0.0
        %776 = vmatpush1.msra.mxu0 0.0
        %777 = vmatprep.subr.mxu0 0.0
        %778 = vmatpush1.msra.mxu0 0.0
        %779 = vmatprep.subr.mxu0 0.0
        %780 = vmatpush1.msra.mxu0 0.0
        %781 = vmatprep.subr.mxu0 0.0
        %782 = vmatpush1.msra.mxu0 0.0
        %783 = vmatprep.subr.mxu0 0.0
        %784 = vmatpush1.msra.mxu0 0.0
        %785 = vmatprep.subr.mxu0 0.0
        %786 = vmatpush1.msra.mxu0 0.0
        %787 = vmatprep.subr.mxu0 0.0
        %788 = vmatpush1.msra.mxu0 0.0
        %789 = vmatprep.subr.mxu0 0.0
        %790 = vmatpush1.msra.mxu0 0.0
        %791 = vmatprep.subr.mxu0 0.0
        %792 = vmatpush1.msra.mxu0 0.0
        %793 = vmatprep.subr.mxu0 0.0
        %794 = vmatpush1.msra.mxu0 0.0
        %795 = vmatprep.subr.mxu0 0.0
        %796 = vmatpush1.msra.mxu0 0.0
        %797 = vmatprep.subr.mxu0 0.0
        %798 = vmatpush1.msra.mxu0 0.0
        %799 = vmatprep.subr.mxu0 0.0
        %800 = vmatpush1.msra.mxu0 0.0
        %801 = vmatprep.subr.mxu0 0.0
        %802 = vmatpush1.msra.mxu0 0.0
        %803 = vmatprep.subr.mxu0 0.0
        %804 = vmatpush1.msra.mxu0 0.0
        %805 = vmatprep.subr.mxu0 0.0
        %806 = vmatpush1.msra.mxu0 0.0
        %807 = vmatprep.subr.mxu0 0.0
        %808 = vmatpush1.msra.mxu0 0.0
        %809 = vmatprep.subr.mxu0 0.0
        %810 = vmatpush1.msra.mxu0 0.0
        %811 = vmatprep.subr.mxu0 0.0
        %812 = vmatpush1.msra.mxu0 0.0
        %813 = vmatprep.subr.mxu0 0.0
        %814 = vmatpush1.msra.mxu0 0.0
        %815 = vmatprep.subr.mxu0 0.0
        %816 = vmatpush1.msra.mxu0 0.0
        %817 = vmatprep.subr.mxu0 0.0
        %818 = vmatpush1.msra.mxu0 0.0
        %819 = vmatprep.subr.mxu0 0.0
        %820 = vmatpush1.msra.mxu0 0.0
        %821 = vmatprep.subr.mxu0 0.0
        %822 = vmatpush1.msra.mxu0 0.0
        %823 = vmatprep.subr.mxu0 0.0
        %824 = vmatpush1.msra.mxu0 0.0
        %825 = vmatprep.subr.mxu0 0.0
        %826 = vmatpush1.msra.mxu0 0.0
        %827 = vmatprep.subr.mxu0 0.0
        %828 = vmatpush1.msra.mxu0 0.0
        %829 = vmatprep.subr.mxu0 0.0
        %830 = vmatpush1.msra.mxu0 0.0
        %831 = vmatprep.subr.mxu0 0.0
        %832 = vmatpush1.msra.mxu0 0.0
        %833 = vmatprep.mubr.f32.mxu0 0.0
        %834 = vmatmul.mubr.f32.gmra.mrb[0].mxu0 %v764
        %v835 = vpop.f32.mrb[0].mxu0
        %v836 = vadd.f32 %v412, %v835
        %v837 = vpop.f32.mrb[0].mxu0
        %838 = vmatprep.mubr.f32.mxu0 0.0
        %839 = vmatmul.mubr.f32.gmra.mrb[0].mxu0 %v767
        %v840 = vpop.f32.mrb[0].mxu0
        %v841 = vadd.f32 %v412, %v840
        %v842 = vpop.f32.mrb[0].mxu0
        %843 = vdwg.mxu0
        %v844 = vmax.f32 %v836, 0.0
        %v845 = vmax.f32 %v841, 0.0
        %s846 = scalar_lea.vmem %s393, 64
        %v847 = vld [vmem:[%s846] sm:$0xff]
        %v848 = vld [vmem:[%s846 + $0x8] sm:$0xff]
        %v849 = vld [vmem:[%s846 + $0x10] sm:$0xff]
        %v850 = vld [vmem:[%s846 + $0x18] sm:$0xff]
        %v852 = vsel %vm597, %v844, 0
        %v855 = vsel %vm597, %v845, 0
        %857 = vmatprep.subr.mxu0 0.0
        %858 = vmatpush1.msra.mxu0 %v847
        %859 = vmatprep.subr.mxu0 0.0
        %860 = vmatpush1.msra.mxu0 %v848
        %861 = vmatprep.subr.mxu0 0.0
        %862 = vmatpush1.msra.mxu0 %v849
        %863 = vmatprep.subr.mxu0 0.0
        %864 = vmatpush1.msra.mxu0 %v850
        %865 = vmatprep.subr.mxu0 0.0
        %866 = vmatpush1.msra.mxu0 0.0
        %867 = vmatprep.subr.mxu0 0.0
        %868 = vmatpush1.msra.mxu0 0.0
        %869 = vmatprep.subr.mxu0 0.0
        %870 = vmatpush1.msra.mxu0 0.0
        %871 = vmatprep.subr.mxu0 0.0
        %872 = vmatpush1.msra.mxu0 0.0
        %873 = vmatprep.subr.mxu0 0.0
        %874 = vmatpush1.msra.mxu0 0.0
        %875 = vmatprep.subr.mxu0 0.0
        %876 = vmatpush1.msra.mxu0 0.0
        %877 = vmatprep.subr.mxu0 0.0
        %878 = vmatpush1.msra.mxu0 0.0
        %879 = vmatprep.subr.mxu0 0.0
        %880 = vmatpush1.msra.mxu0 0.0
        %881 = vmatprep.subr.mxu0 0.0
        %882 = vmatpush1.msra.mxu0 0.0
        %883 = vmatprep.subr.mxu0 0.0
        %884 = vmatpush1.msra.mxu0 0.0
        %885 = vmatprep.subr.mxu0 0.0
        %886 = vmatpush1.msra.mxu0 0.0
        %887 = vmatprep.subr.mxu0 0.0
        %888 = vmatpush1.msra.mxu0 0.0
        %889 = vmatprep.subr.mxu0 0.0
        %890 = vmatpush1.msra.mxu0 0.0
        %891 = vmatprep.subr.mxu0 0.0
        %892 = vmatpush1.msra.mxu0 0.0
        %893 = vmatprep.subr.mxu0 0.0
        %894 = vmatpush1.msra.mxu0 0.0
        %895 = vmatprep.subr.mxu0 0.0
        %896 = vmatpush1.msra.mxu0 0.0
        %897 = vmatprep.subr.mxu0 0.0
        %898 = vmatpush1.msra.mxu0 0.0
        %899 = vmatprep.subr.mxu0 0.0
        %900 = vmatpush1.msra.mxu0 0.0
        %901 = vmatprep.subr.mxu0 0.0
        %902 = vmatpush1.msra.mxu0 0.0
        %903 = vmatprep.subr.mxu0 0.0
        %904 = vmatpush1.msra.mxu0 0.0
        %905 = vmatprep.subr.mxu0 0.0
        %906 = vmatpush1.msra.mxu0 0.0
        %907 = vmatprep.subr.mxu0 0.0
        %908 = vmatpush1.msra.mxu0 0.0
        %909 = vmatprep.subr.mxu0 0.0
        %910 = vmatpush1.msra.mxu0 0.0
        %911 = vmatprep.subr.mxu0 0.0
        %912 = vmatpush1.msra.mxu0 0.0
        %913 = vmatprep.subr.mxu0 0.0
        %914 = vmatpush1.msra.mxu0 0.0
        %915 = vmatprep.subr.mxu0 0.0
        %916 = vmatpush1.msra.mxu0 0.0
        %917 = vmatprep.subr.mxu0 0.0
        %918 = vmatpush1.msra.mxu0 0.0
        %919 = vmatprep.subr.mxu0 0.0
        %920 = vmatpush1.msra.mxu0 0.0
        %921 = vmatprep.mubr.f32.mxu0 0.0
        %922 = vmatmul.mubr.f32.gmra.mrb[0].mxu0 %v852
        %v923 = vpop.f32.mrb[0].mxu0
        %v924 = vadd.f32 0.0, %v923
        %v925 = vpop.f32.mrb[0].mxu0
        %926 = vmatprep.mubr.f32.mxu0 0.0
        %927 = vmatmul.mubr.f32.gmra.mrb[0].mxu0 %v855
        %v928 = vpop.f32.mrb[0].mxu0
        %v929 = vadd.f32 0.0, %v928
        %v930 = vpop.f32.mrb[0].mxu0
        %931 = vdwg.mxu0
        %v932 = vadd.f32 %v752, %v924
        %v933 = vadd.f32 %v757, %v929
        %s934 = scalar_lea.vmem %s342, 48 [#allocation3]
        %v935 = vld [vmem:[%s934] sm:$0xff]
        %v936 = vld [vmem:[%s934 + $0x8] sm:$0xff]
        %v938 = vsel %vm414, %v935, 0
        %v941 = vsel %vm414, %v936, 0
        %943 = vmatprep.subr.mxu0 0.0
        %944 = vmatpush1.msra.mxu0 %v405
        %945 = vmatprep.subr.mxu0 0.0
        %946 = vmatpush1.msra.mxu0 %v423
        %947 = vmatprep.subr.mxu0 0.0
        %948 = vmatpush1.msra.mxu0 0.0
        %949 = vmatprep.subr.mxu0 0.0
        %950 = vmatpush1.msra.mxu0 0.0
        %951 = vmatprep.subr.mxu0 0.0
        %952 = vmatpush1.msra.mxu0 0.0
        %953 = vmatprep.subr.mxu0 0.0
        %954 = vmatpush1.msra.mxu0 0.0
        %955 = vmatprep.subr.mxu0 0.0
        %956 = vmatpush1.msra.mxu0 0.0
        %957 = vmatprep.subr.mxu0 0.0
        %958 = vmatpush1.msra.mxu0 0.0
        %959 = vmatprep.subr.mxu0 0.0
        %960 = vmatpush1.msra.mxu0 0.0
        %961 = vmatprep.subr.mxu0 0.0
        %962 = vmatpush1.msra.mxu0 0.0
        %963 = vmatprep.subr.mxu0 0.0
        %964 = vmatpush1.msra.mxu0 0.0
        %965 = vmatprep.subr.mxu0 0.0
        %966 = vmatpush1.msra.mxu0 0.0
        %967 = vmatprep.subr.mxu0 0.0
        %968 = vmatpush1.msra.mxu0 0.0
        %969 = vmatprep.subr.mxu0 0.0
        %970 = vmatpush1.msra.mxu0 0.0
        %971 = vmatprep.subr.mxu0 0.0
        %972 = vmatpush1.msra.mxu0 0.0
        %973 = vmatprep.subr.mxu0 0.0
        %974 = vmatpush1.msra.mxu0 0.0
        %975 = vmatprep.subr.mxu0 0.0
        %976 = vmatpush1.msra.mxu0 0.0
        %977 = vmatprep.subr.mxu0 0.0
        %978 = vmatpush1.msra.mxu0 0.0
        %979 = vmatprep.subr.mxu0 0.0
        %980 = vmatpush1.msra.mxu0 0.0
        %981 = vmatprep.subr.mxu0 0.0
        %982 = vmatpush1.msra.mxu0 0.0
        %983 = vmatprep.subr.mxu0 0.0
        %984 = vmatpush1.msra.mxu0 0.0
        %985 = vmatprep.subr.mxu0 0.0
        %986 = vmatpush1.msra.mxu0 0.0
        %987 = vmatprep.subr.mxu0 0.0
        %988 = vmatpush1.msra.mxu0 0.0
        %989 = vmatprep.subr.mxu0 0.0
        %990 = vmatpush1.msra.mxu0 0.0
        %991 = vmatprep.subr.mxu0 0.0
        %992 = vmatpush1.msra.mxu0 0.0
        %993 = vmatprep.subr.mxu0 0.0
        %994 = vmatpush1.msra.mxu0 0.0
        %995 = vmatprep.subr.mxu0 0.0
        %996 = vmatpush1.msra.mxu0 0.0
        %997 = vmatprep.subr.mxu0 0.0
        %998 = vmatpush1.msra.mxu0 0.0
        %999 = vmatprep.subr.mxu0 0.0
        %1000 = vmatpush1.msra.mxu0 0.0
        %1001 = vmatprep.subr.mxu0 0.0
        %1002 = vmatpush1.msra.mxu0 0.0
        %1003 = vmatprep.subr.mxu0 0.0
        %1004 = vmatpush1.msra.mxu0 0.0
        %1005 = vmatprep.subr.mxu0 0.0
        %1006 = vmatpush1.msra.mxu0 0.0
        %1007 = vmatprep.mubr.f32.mxu0 0.0
        %1008 = vmatmul.mubr.f32.gmra.mrb[0].mxu0 %v938
        %v1009 = vpop.f32.mrb[0].mxu0
        %v1010 = vadd.f32 %v412, %v1009
        %v1011 = vpop.f32.mrb[0].mxu0
        %1012 = vmatprep.mubr.f32.mxu0 0.0
        %1013 = vmatmul.mubr.f32.gmra.mrb[0].mxu0 %v941
        %v1014 = vpop.f32.mrb[0].mxu0
        %v1015 = vadd.f32 %v412, %v1014
        %v1016 = vpop.f32.mrb[0].mxu0
        %1017 = vdwg.mxu0
        %v1018 = vmax.f32 %v1010, 0.0
        %v1019 = vmax.f32 %v1015, 0.0
        %s1020 = scalar_lea.vmem %s393, 96
        %v1021 = vld [vmem:[%s1020] sm:$0xff]
        %v1022 = vld [vmem:[%s1020 + $0x8] sm:$0xff]
        %v1023 = vld [vmem:[%s1020 + $0x10] sm:$0xff]
        %v1024 = vld [vmem:[%s1020 + $0x18] sm:$0xff]
        %v1026 = vsel %vm597, %v1018, 0
        %v1029 = vsel %vm597, %v1019, 0
        %1031 = vmatprep.subr.mxu0 0.0
        %1032 = vmatpush1.msra.mxu0 %v1021
        %1033 = vmatprep.subr.mxu0 0.0
        %1034 = vmatpush1.msra.mxu0 %v1022
        %1035 = vmatprep.subr.mxu0 0.0
        %1036 = vmatpush1.msra.mxu0 %v1023
        %1037 = vmatprep.subr.mxu0 0.0
        %1038 = vmatpush1.msra.mxu0 %v1024
        %1039 = vmatprep.subr.mxu0 0.0
        %1040 = vmatpush1.msra.mxu0 0.0
        %1041 = vmatprep.subr.mxu0 0.0
        %1042 = vmatpush1.msra.mxu0 0.0
        %1043 = vmatprep.subr.mxu0 0.0
        %1044 = vmatpush1.msra.mxu0 0.0
        %1045 = vmatprep.subr.mxu0 0.0
        %1046 = vmatpush1.msra.mxu0 0.0
        %1047 = vmatprep.subr.mxu0 0.0
        %1048 = vmatpush1.msra.mxu0 0.0
        %1049 = vmatprep.subr.mxu0 0.0
        %1050 = vmatpush1.msra.mxu0 0.0
        %1051 = vmatprep.subr.mxu0 0.0
        %1052 = vmatpush1.msra.mxu0 0.0
        %1053 = vmatprep.subr.mxu0 0.0
        %1054 = vmatpush1.msra.mxu0 0.0
        %1055 = vmatprep.subr.mxu0 0.0
        %1056 = vmatpush1.msra.mxu0 0.0
        %1057 = vmatprep.subr.mxu0 0.0
        %1058 = vmatpush1.msra.mxu0 0.0
        %1059 = vmatprep.subr.mxu0 0.0
        %1060 = vmatpush1.msra.mxu0 0.0
        %1061 = vmatprep.subr.mxu0 0.0
        %1062 = vmatpush1.msra.mxu0 0.0
        %1063 = vmatprep.subr.mxu0 0.0
        %1064 = vmatpush1.msra.mxu0 0.0
        %1065 = vmatprep.subr.mxu0 0.0
        %1066 = vmatpush1.msra.mxu0 0.0
        %1067 = vmatprep.subr.mxu0 0.0
        %1068 = vmatpush1.msra.mxu0 0.0
        %1069 = vmatprep.subr.mxu0 0.0
        %1070 = vmatpush1.msra.mxu0 0.0
        %1071 = vmatprep.subr.mxu0 0.0
        %1072 = vmatpush1.msra.mxu0 0.0
        %1073 = vmatprep.subr.mxu0 0.0
        %1074 = vmatpush1.msra.mxu0 0.0
        %1075 = vmatprep.subr.mxu0 0.0
        %1076 = vmatpush1.msra.mxu0 0.0
        %1077 = vmatprep.subr.mxu0 0.0
        %1078 = vmatpush1.msra.mxu0 0.0
        %1079 = vmatprep.subr.mxu0 0.0
        %1080 = vmatpush1.msra.mxu0 0.0
        %1081 = vmatprep.subr.mxu0 0.0
        %1082 = vmatpush1.msra.mxu0 0.0
        %1083 = vmatprep.subr.mxu0 0.0
        %1084 = vmatpush1.msra.mxu0 0.0
        %1085 = vmatprep.subr.mxu0 0.0
        %1086 = vmatpush1.msra.mxu0 0.0
        %1087 = vmatprep.subr.mxu0 0.0
        %1088 = vmatpush1.msra.mxu0 0.0
        %1089 = vmatprep.subr.mxu0 0.0
        %1090 = vmatpush1.msra.mxu0 0.0
        %1091 = vmatprep.subr.mxu0 0.0
        %1092 = vmatpush1.msra.mxu0 0.0
        %1093 = vmatprep.subr.mxu0 0.0
        %1094 = vmatpush1.msra.mxu0 0.0
        %1095 = vmatprep.mubr.f32.mxu0 0.0
        %1096 = vmatmul.mubr.f32.gmra.mrb[0].mxu0 %v1026
        %v1097 = vpop.f32.mrb[0].mxu0
        %v1098 = vadd.f32 0.0, %v1097
        %v1099 = vpop.f32.mrb[0].mxu0
        %1100 = vmatprep.mubr.f32.mxu0 0.0
        %1101 = vmatmul.mubr.f32.gmra.mrb[0].mxu0 %v1029
        %v1102 = vpop.f32.mrb[0].mxu0
        %v1103 = vadd.f32 0.0, %v1102
        %v1104 = vpop.f32.mrb[0].mxu0
        %1105 = vdwg.mxu0
        %v1106 = vadd.f32 %v932, %v1098
        %v1107 = vadd.f32 %v933, %v1103
        %s1108 = scalar_lea.vmem %s342, 64 [#allocation3]
        %v1109 = vld [vmem:[%s1108] sm:$0xff]
        %v1110 = vld [vmem:[%s1108 + $0x8] sm:$0xff]
        %v1112 = vsel %vm414, %v1109, 0
        %v1115 = vsel %vm414, %v1110, 0
        %1117 = vmatprep.subr.mxu0 0.0
        %1118 = vmatpush1.msra.mxu0 %v405
        %1119 = vmatprep.subr.mxu0 0.0
        %1120 = vmatpush1.msra.mxu0 %v423
        %1121 = vmatprep.subr.mxu0 0.0
        %1122 = vmatpush1.msra.mxu0 0.0
        %1123 = vmatprep.subr.mxu0 0.0
        %1124 = vmatpush1.msra.mxu0 0.0
        %1125 = vmatprep.subr.mxu0 0.0
        %1126 = vmatpush1.msra.mxu0 0.0
        %1127 = vmatprep.subr.mxu0 0.0
        %1128 = vmatpush1.msra.mxu0 0.0
        %1129 = vmatprep.subr.mxu0 0.0
        %1130 = vmatpush1.msra.mxu0 0.0
        %1131 = vmatprep.subr.mxu0 0.0
        %1132 = vmatpush1.msra.mxu0 0.0
        %1133 = vmatprep.subr.mxu0 0.0
        %1134 = vmatpush1.msra.mxu0 0.0
        %1135 = vmatprep.subr.mxu0 0.0
        %1136 = vmatpush1.msra.mxu0 0.0
        %1137 = vmatprep.subr.mxu0 0.0
        %1138 = vmatpush1.msra.mxu0 0.0
        %1139 = vmatprep.subr.mxu0 0.0
        %1140 = vmatpush1.msra.mxu0 0.0
        %1141 = vmatprep.subr.mxu0 0.0
        %1142 = vmatpush1.msra.mxu0 0.0
        %1143 = vmatprep.subr.mxu0 0.0
        %1144 = vmatpush1.msra.mxu0 0.0
        %1145 = vmatprep.subr.mxu0 0.0
        %1146 = vmatpush1.msra.mxu0 0.0
        %1147 = vmatprep.subr.mxu0 0.0
        %1148 = vmatpush1.msra.mxu0 0.0
        %1149 = vmatprep.subr.mxu0 0.0
        %1150 = vmatpush1.msra.mxu0 0.0
        %1151 = vmatprep.subr.mxu0 0.0
        %1152 = vmatpush1.msra.mxu0 0.0
        %1153 = vmatprep.subr.mxu0 0.0
        %1154 = vmatpush1.msra.mxu0 0.0
        %1155 = vmatprep.subr.mxu0 0.0
        %1156 = vmatpush1.msra.mxu0 0.0
        %1157 = vmatprep.subr.mxu0 0.0
        %1158 = vmatpush1.msra.mxu0 0.0
        %1159 = vmatprep.subr.mxu0 0.0
        %1160 = vmatpush1.msra.mxu0 0.0
        %1161 = vmatprep.subr.mxu0 0.0
        %1162 = vmatpush1.msra.mxu0 0.0
        %1163 = vmatprep.subr.mxu0 0.0
        %1164 = vmatpush1.msra.mxu0 0.0
        %1165 = vmatprep.subr.mxu0 0.0
        %1166 = vmatpush1.msra.mxu0 0.0
        %1167 = vmatprep.subr.mxu0 0.0
        %1168 = vmatpush1.msra.mxu0 0.0
        %1169 = vmatprep.subr.mxu0 0.0
        %1170 = vmatpush1.msra.mxu0 0.0
        %1171 = vmatprep.subr.mxu0 0.0
        %1172 = vmatpush1.msra.mxu0 0.0
        %1173 = vmatprep.subr.mxu0 0.0
        %1174 = vmatpush1.msra.mxu0 0.0
        %1175 = vmatprep.subr.mxu0 0.0
        %1176 = vmatpush1.msra.mxu0 0.0
        %1177 = vmatprep.subr.mxu0 0.0
        %1178 = vmatpush1.msra.mxu0 0.0
        %1179 = vmatprep.subr.mxu0 0.0
        %1180 = vmatpush1.msra.mxu0 0.0
        %1181 = vmatprep.mubr.f32.mxu0 0.0
        %1182 = vmatmul.mubr.f32.gmra.mrb[0].mxu0 %v1112
        %v1183 = vpop.f32.mrb[0].mxu0
        %v1184 = vadd.f32 %v412, %v1183
        %v1185 = vpop.f32.mrb[0].mxu0
        %1186 = vmatprep.mubr.f32.mxu0 0.0
        %1187 = vmatmul.mubr.f32.gmra.mrb[0].mxu0 %v1115
        %v1188 = vpop.f32.mrb[0].mxu0
        %v1189 = vadd.f32 %v412, %v1188
        %v1190 = vpop.f32.mrb[0].mxu0
        %1191 = vdwg.mxu0
        %v1192 = vmax.f32 %v1184, 0.0
        %v1193 = vmax.f32 %v1189, 0.0
        %s1194 = scalar_lea.vmem %s393, 128
        %v1195 = vld [vmem:[%s1194] sm:$0xff]
        %v1196 = vld [vmem:[%s1194 + $0x8] sm:$0xff]
        %v1197 = vld [vmem:[%s1194 + $0x10] sm:$0xff]
        %v1198 = vld [vmem:[%s1194 + $0x18] sm:$0xff]
        %v1200 = vsel %vm597, %v1192, 0
        %v1203 = vsel %vm597, %v1193, 0
        %1205 = vmatprep.subr.mxu0 0.0
        %1206 = vmatpush1.msra.mxu0 %v1195
        %1207 = vmatprep.subr.mxu0 0.0
        %1208 = vmatpush1.msra.mxu0 %v1196
        %1209 = vmatprep.subr.mxu0 0.0
        %1210 = vmatpush1.msra.mxu0 %v1197
        %1211 = vmatprep.subr.mxu0 0.0
        %1212 = vmatpush1.msra.mxu0 %v1198
        %1213 = vmatprep.subr.mxu0 0.0
        %1214 = vmatpush1.msra.mxu0 0.0
        %1215 = vmatprep.subr.mxu0 0.0
        %1216 = vmatpush1.msra.mxu0 0.0
        %1217 = vmatprep.subr.mxu0 0.0
        %1218 = vmatpush1.msra.mxu0 0.0
        %1219 = vmatprep.subr.mxu0 0.0
        %1220 = vmatpush1.msra.mxu0 0.0
        %1221 = vmatprep.subr.mxu0 0.0
        %1222 = vmatpush1.msra.mxu0 0.0
        %1223 = vmatprep.subr.mxu0 0.0
        %1224 = vmatpush1.msra.mxu0 0.0
        %1225 = vmatprep.subr.mxu0 0.0
        %1226 = vmatpush1.msra.mxu0 0.0
        %1227 = vmatprep.subr.mxu0 0.0
        %1228 = vmatpush1.msra.mxu0 0.0
        %1229 = vmatprep.subr.mxu0 0.0
        %1230 = vmatpush1.msra.mxu0 0.0
        %1231 = vmatprep.subr.mxu0 0.0
        %1232 = vmatpush1.msra.mxu0 0.0
        %1233 = vmatprep.subr.mxu0 0.0
        %1234 = vmatpush1.msra.mxu0 0.0
        %1235 = vmatprep.subr.mxu0 0.0
        %1236 = vmatpush1.msra.mxu0 0.0
        %1237 = vmatprep.subr.mxu0 0.0
        %1238 = vmatpush1.msra.mxu0 0.0
        %1239 = vmatprep.subr.mxu0 0.0
        %1240 = vmatpush1.msra.mxu0 0.0
        %1241 = vmatprep.subr.mxu0 0.0
        %1242 = vmatpush1.msra.mxu0 0.0
        %1243 = vmatprep.subr.mxu0 0.0
        %1244 = vmatpush1.msra.mxu0 0.0
        %1245 = vmatprep.subr.mxu0 0.0
        %1246 = vmatpush1.msra.mxu0 0.0
        %1247 = vmatprep.subr.mxu0 0.0
        %1248 = vmatpush1.msra.mxu0 0.0
        %1249 = vmatprep.subr.mxu0 0.0
        %1250 = vmatpush1.msra.mxu0 0.0
        %1251 = vmatprep.subr.mxu0 0.0
        %1252 = vmatpush1.msra.mxu0 0.0
        %1253 = vmatprep.subr.mxu0 0.0
        %1254 = vmatpush1.msra.mxu0 0.0
        %1255 = vmatprep.subr.mxu0 0.0
        %1256 = vmatpush1.msra.mxu0 0.0
        %1257 = vmatprep.subr.mxu0 0.0
        %1258 = vmatpush1.msra.mxu0 0.0
        %1259 = vmatprep.subr.mxu0 0.0
        %1260 = vmatpush1.msra.mxu0 0.0
        %1261 = vmatprep.subr.mxu0 0.0
        %1262 = vmatpush1.msra.mxu0 0.0
        %1263 = vmatprep.subr.mxu0 0.0
        %1264 = vmatpush1.msra.mxu0 0.0
        %1265 = vmatprep.subr.mxu0 0.0
        %1266 = vmatpush1.msra.mxu0 0.0
        %1267 = vmatprep.subr.mxu0 0.0
        %1268 = vmatpush1.msra.mxu0 0.0
        %1269 = vmatprep.mubr.f32.mxu0 0.0
        %1270 = vmatmul.mubr.f32.gmra.mrb[0].mxu0 %v1200
        %v1271 = vpop.f32.mrb[0].mxu0
        %v1272 = vadd.f32 0.0, %v1271
        %v1273 = vpop.f32.mrb[0].mxu0
        %1274 = vmatprep.mubr.f32.mxu0 0.0
        %1275 = vmatmul.mubr.f32.gmra.mrb[0].mxu0 %v1203
        %v1276 = vpop.f32.mrb[0].mxu0
        %v1277 = vadd.f32 0.0, %v1276
        %v1278 = vpop.f32.mrb[0].mxu0
        %1279 = vdwg.mxu0
        %v1280 = vadd.f32 %v1106, %v1272
        %v1281 = vadd.f32 %v1107, %v1277
        %s1282 = scalar_lea.vmem %s342, 80 [#allocation3]
        %v1283 = vld [vmem:[%s1282] sm:$0xff]
        %v1284 = vld [vmem:[%s1282 + $0x8] sm:$0xff]
        %v1286 = vsel %vm414, %v1283, 0
        %v1289 = vsel %vm414, %v1284, 0
        %1291 = vmatprep.subr.mxu0 0.0
        %1292 = vmatpush1.msra.mxu0 %v405
        %1293 = vmatprep.subr.mxu0 0.0
        %1294 = vmatpush1.msra.mxu0 %v423
        %1295 = vmatprep.subr.mxu0 0.0
        %1296 = vmatpush1.msra.mxu0 0.0
        %1297 = vmatprep.subr.mxu0 0.0
        %1298 = vmatpush1.msra.mxu0 0.0
        %1299 = vmatprep.subr.mxu0 0.0
        %1300 = vmatpush1.msra.mxu0 0.0
        %1301 = vmatprep.subr.mxu0 0.0
        %1302 = vmatpush1.msra.mxu0 0.0
        %1303 = vmatprep.subr.mxu0 0.0
        %1304 = vmatpush1.msra.mxu0 0.0
        %1305 = vmatprep.subr.mxu0 0.0
        %1306 = vmatpush1.msra.mxu0 0.0
        %1307 = vmatprep.subr.mxu0 0.0
        %1308 = vmatpush1.msra.mxu0 0.0
        %1309 = vmatprep.subr.mxu0 0.0
        %1310 = vmatpush1.msra.mxu0 0.0
        %1311 = vmatprep.subr.mxu0 0.0
        %1312 = vmatpush1.msra.mxu0 0.0
        %1313 = vmatprep.subr.mxu0 0.0
        %1314 = vmatpush1.msra.mxu0 0.0
        %1315 = vmatprep.subr.mxu0 0.0
        %1316 = vmatpush1.msra.mxu0 0.0
        %1317 = vmatprep.subr.mxu0 0.0
        %1318 = vmatpush1.msra.mxu0 0.0
        %1319 = vmatprep.subr.mxu0 0.0
        %1320 = vmatpush1.msra.mxu0 0.0
        %1321 = vmatprep.subr.mxu0 0.0
        %1322 = vmatpush1.msra.mxu0 0.0
        %1323 = vmatprep.subr.mxu0 0.0
        %1324 = vmatpush1.msra.mxu0 0.0
        %1325 = vmatprep.subr.mxu0 0.0
        %1326 = vmatpush1.msra.mxu0 0.0
        %1327 = vmatprep.subr.mxu0 0.0
        %1328 = vmatpush1.msra.mxu0 0.0
        %1329 = vmatprep.subr.mxu0 0.0
        %1330 = vmatpush1.msra.mxu0 0.0
        %1331 = vmatprep.subr.mxu0 0.0
        %1332 = vmatpush1.msra.mxu0 0.0
        %1333 = vmatprep.subr.mxu0 0.0
        %1334 = vmatpush1.msra.mxu0 0.0
        %1335 = vmatprep.subr.mxu0 0.0
        %1336 = vmatpush1.msra.mxu0 0.0
        %1337 = vmatprep.subr.mxu0 0.0
        %1338 = vmatpush1.msra.mxu0 0.0
        %1339 = vmatprep.subr.mxu0 0.0
        %1340 = vmatpush1.msra.mxu0 0.0
        %1341 = vmatprep.subr.mxu0 0.0
        %1342 = vmatpush1.msra.mxu0 0.0
        %1343 = vmatprep.subr.mxu0 0.0
        %1344 = vmatpush1.msra.mxu0 0.0
        %1345 = vmatprep.subr.mxu0 0.0
        %1346 = vmatpush1.msra.mxu0 0.0
        %1347 = vmatprep.subr.mxu0 0.0
        %1348 = vmatpush1.msra.mxu0 0.0
        %1349 = vmatprep.subr.mxu0 0.0
        %1350 = vmatpush1.msra.mxu0 0.0
        %1351 = vmatprep.subr.mxu0 0.0
        %1352 = vmatpush1.msra.mxu0 0.0
        %1353 = vmatprep.subr.mxu0 0.0
        %1354 = vmatpush1.msra.mxu0 0.0
        %1355 = vmatprep.mubr.f32.mxu0 0.0
        %1356 = vmatmul.mubr.f32.gmra.mrb[0].mxu0 %v1286
        %v1357 = vpop.f32.mrb[0].mxu0
        %v1358 = vadd.f32 %v412, %v1357
        %v1359 = vpop.f32.mrb[0].mxu0
        %1360 = vmatprep.mubr.f32.mxu0 0.0
        %1361 = vmatmul.mubr.f32.gmra.mrb[0].mxu0 %v1289
        %v1362 = vpop.f32.mrb[0].mxu0
        %v1363 = vadd.f32 %v412, %v1362
        %v1364 = vpop.f32.mrb[0].mxu0
        %1365 = vdwg.mxu0
        %v1366 = vmax.f32 %v1358, 0.0
        %v1367 = vmax.f32 %v1363, 0.0
        %s1368 = scalar_lea.vmem %s393, 160
        %v1369 = vld [vmem:[%s1368] sm:$0xff]
        %v1370 = vld [vmem:[%s1368 + $0x8] sm:$0xff]
        %v1371 = vld [vmem:[%s1368 + $0x10] sm:$0xff]
        %v1372 = vld [vmem:[%s1368 + $0x18] sm:$0xff]
        %v1374 = vsel %vm597, %v1366, 0
        %v1377 = vsel %vm597, %v1367, 0
        %1379 = vmatprep.subr.mxu0 0.0
        %1380 = vmatpush1.msra.mxu0 %v1369
        %1381 = vmatprep.subr.mxu0 0.0
        %1382 = vmatpush1.msra.mxu0 %v1370
        %1383 = vmatprep.subr.mxu0 0.0
        %1384 = vmatpush1.msra.mxu0 %v1371
        %1385 = vmatprep.subr.mxu0 0.0
        %1386 = vmatpush1.msra.mxu0 %v1372
        %1387 = vmatprep.subr.mxu0 0.0
        %1388 = vmatpush1.msra.mxu0 0.0
        %1389 = vmatprep.subr.mxu0 0.0
        %1390 = vmatpush1.msra.mxu0 0.0
        %1391 = vmatprep.subr.mxu0 0.0
        %1392 = vmatpush1.msra.mxu0 0.0
        %1393 = vmatprep.subr.mxu0 0.0
        %1394 = vmatpush1.msra.mxu0 0.0
        %1395 = vmatprep.subr.mxu0 0.0
        %1396 = vmatpush1.msra.mxu0 0.0
        %1397 = vmatprep.subr.mxu0 0.0
        %1398 = vmatpush1.msra.mxu0 0.0
        %1399 = vmatprep.subr.mxu0 0.0
        %1400 = vmatpush1.msra.mxu0 0.0
        %1401 = vmatprep.subr.mxu0 0.0
        %1402 = vmatpush1.msra.mxu0 0.0
        %1403 = vmatprep.subr.mxu0 0.0
        %1404 = vmatpush1.msra.mxu0 0.0
        %1405 = vmatprep.subr.mxu0 0.0
        %1406 = vmatpush1.msra.mxu0 0.0
        %1407 = vmatprep.subr.mxu0 0.0
        %1408 = vmatpush1.msra.mxu0 0.0
        %1409 = vmatprep.subr.mxu0 0.0
        %1410 = vmatpush1.msra.mxu0 0.0
        %1411 = vmatprep.subr.mxu0 0.0
        %1412 = vmatpush1.msra.mxu0 0.0
        %1413 = vmatprep.subr.mxu0 0.0
        %1414 = vmatpush1.msra.mxu0 0.0
        %1415 = vmatprep.subr.mxu0 0.0
        %1416 = vmatpush1.msra.mxu0 0.0
        %1417 = vmatprep.subr.mxu0 0.0
        %1418 = vmatpush1.msra.mxu0 0.0
        %1419 = vmatprep.subr.mxu0 0.0
        %1420 = vmatpush1.msra.mxu0 0.0
        %1421 = vmatprep.subr.mxu0 0.0
        %1422 = vmatpush1.msra.mxu0 0.0
        %1423 = vmatprep.subr.mxu0 0.0
        %1424 = vmatpush1.msra.mxu0 0.0
        %1425 = vmatprep.subr.mxu0 0.0
        %1426 = vmatpush1.msra.mxu0 0.0
        %1427 = vmatprep.subr.mxu0 0.0
        %1428 = vmatpush1.msra.mxu0 0.0
        %1429 = vmatprep.subr.mxu0 0.0
        %1430 = vmatpush1.msra.mxu0 0.0
        %1431 = vmatprep.subr.mxu0 0.0
        %1432 = vmatpush1.msra.mxu0 0.0
        %1433 = vmatprep.subr.mxu0 0.0
        %1434 = vmatpush1.msra.mxu0 0.0
        %1435 = vmatprep.subr.mxu0 0.0
        %1436 = vmatpush1.msra.mxu0 0.0
        %1437 = vmatprep.subr.mxu0 0.0
        %1438 = vmatpush1.msra.mxu0 0.0
        %1439 = vmatprep.subr.mxu0 0.0
        %1440 = vmatpush1.msra.mxu0 0.0
        %1441 = vmatprep.subr.mxu0 0.0
        %1442 = vmatpush1.msra.mxu0 0.0
        %1443 = vmatprep.mubr.f32.mxu0 0.0
        %1444 = vmatmul.mubr.f32.gmra.mrb[0].mxu0 %v1374
        %v1445 = vpop.f32.mrb[0].mxu0
        %v1446 = vadd.f32 0.0, %v1445
        %v1447 = vpop.f32.mrb[0].mxu0
        %1448 = vmatprep.mubr.f32.mxu0 0.0
        %1449 = vmatmul.mubr.f32.gmra.mrb[0].mxu0 %v1377
        %v1450 = vpop.f32.mrb[0].mxu0
        %v1451 = vadd.f32 0.0, %v1450
        %v1452 = vpop.f32.mrb[0].mxu0
        %1453 = vdwg.mxu0
        %v1454 = vadd.f32 %v1280, %v1446
        %v1455 = vadd.f32 %v1281, %v1451
        %v1456 = vld [vmem:[#allocation2] sm:$0xff]
        %v1457 = vld [vmem:[#allocation2 + $0x8] sm:$0xff]
        %v1458 = vadd.f32 %v1456, %v1454
        %v1459 = vadd.f32 %v1457, %v1455
        %1460 = vst.msk [vmem:[#allocation2] sm:$0xff] %vm597, %v1458
        %1461 = vst.msk [vmem:[#allocation2 + $0x8] sm:$0xff] %vm597, %v1459
        %p1462 = scmp.eq.s32.totalorder %s25, 2
        // Predicated region
        $region87: #{tpu_custom_call.1} parent=77 // pred_check
          %p1463 = pneg %p1462
        $region88: #{tpu_custom_call.1} parent=77 // pred_check_branch
          %1465 = sbr.rel (%p1463) target = $region90
        $region89: #{tpu_custom_call.1} parent=77 // pred_region
          %v1466 = vld [vmem:[#allocation2] sm:$0xff]
          %v1467 = vld [vmem:[#allocation2 + $0x8] sm:$0xff]
          %v1468 = vld [vmem:[%s384] sm:$0xff]
          %v1469 = vld [vmem:[%s384 + $0x8] sm:$0xff]
          %1471 = vset.pattern.permute.xlu0 0
          %1472 = vperm.xlu0 %1471, %v1468
          %v1473 = vpop.permute.xlu0 %1472
          %1476 = vset.pattern.permute.xlu0 0
          %1477 = vperm.xlu0 %1476, %v1469
          %v1478 = vpop.permute.xlu0 %1477
          %v1480 = vmul.f32 %v1466, %v1473
          %v1481 = vmul.f32 %v1467, %v1478
          %v1482 = vld [vmem:[%s5] sm:$0x1]
          %v1484 = vlaneseq
          %v1485 = vshrl.u32 %v1484, 7
          %v1486 = vsub.s32 0, %v1485
          %v1487 = vrot.slane %v1482, %v1486
          %v1489 = vadd.f32 %v1480, %v1487
          %v1490 = vadd.f32 %v1481, %v1487
          %1491 = vst.msk [vmem:[%s379] sm:$0xff] %vm597, %v1489
          %1492 = vst.msk [vmem:[%s379 + $0x8] sm:$0xff] %vm597, %v1490
        $region90: #{tpu_custom_call.1} parent=77 // pred_fallthru
          _
        %s1493 = sand.u32 %s183, 1
        %s1494 = scalar_lea.sflag [#allocation5], %s1493
        %s1495 = sand.u32 %s183, 1
        %s1496 = smul.addr %s1495, 16
        %s1497 = scalar_lea.vmem [#allocation4], %s1496
        // Predicated region
        $region91: #{tpu_custom_call.1} parent=77 // pred_check
          %p1498 = pneg %p193
        $region92: #{tpu_custom_call.1} parent=77 // pred_check_branch
          %1500 = sbr.rel (%p1498) target = $region94
        $region93: #{tpu_custom_call.1} parent=77 // pred_region
          %s1501 = smul.u32 2, %s24
          %s1503 = ssub.s32 256, 256
          %1504 = vsyncadd %s1494, %s1503
          %s1505 = smul.addr %s1501, 128
          %s1506 = scalar_lea.hbm %s6, %s1505
          %s1507 = sshll.u32 %s1497, 4
          %s1508 = int_to_ptr.vmem [resolvable:$true] %s1507
          %1513 = dma.vmem_to_hbm [thread:$0]  %s1508, 256, %s1506, %s1494, 128, 128, 8
        $region94: #{tpu_custom_call.1} parent=77 // pred_fallthru
          _
      $region78: #{tpu_custom_call.1} parent=5 // pred_fallthru
        _
      %p1514 = scmp.le.s32.totalorder 2, %s15
      // Predicated region
      $region95: #{tpu_custom_call.1} parent=5 // pred_check
        %p1515 = pneg %p1514
      $region96: #{tpu_custom_call.1} parent=5 // pred_check_branch
        %1517 = sbr.rel (%p1515) target = $region98
      $region97: #{tpu_custom_call.1} parent=5 // pred_region
        %s1518 = ssub.s32 %s15, 2
        // Predicated region
        $region99: #{tpu_custom_call.1} parent=97 // pred_check
          %p1519 = pneg %p199
        $region100: #{tpu_custom_call.1} parent=97 // pred_check_branch
          %1521 = sbr.rel (%p1519) target = $region102
        $region101: #{tpu_custom_call.1} parent=97 // pred_region
          %s1522 = sand.u32 %s184, 1
          %s1523 = scalar_lea.sflag [#allocation5], %s1522
          %s1524 = sand.u32 %s184, 1
          %s1525 = smul.addr %s1524, 16
          %s1526 = scalar_lea.vmem [#allocation4], %s1525
          %1527 = dma.done %s1523, 256
        $region102: #{tpu_custom_call.1} parent=97 // pred_fallthru
          _
      $region98: #{tpu_custom_call.1} parent=5 // pred_fallthru
        _
    $region6: #{tpu_custom_call.1} parent=1 // loop_footer
      %s19 = sadd.s32 1, %s15
    $region7: #{tpu_custom_call.1} parent=1 // loop_footer_branch
      %14 = sbr.rel target = $region3
    $region8: #{tpu_custom_call.1} parent=1 // loop_exit
      _
    %1528 = vsyncpa [#allocation5], 1
    %s1529 = scalar_lea.sflag [#allocation5], 1
    %1530 = vsyncpa %s1529, 1

</llo_original>
